<compile_context>
chip_gen: v7x
topology: tpu7x:2x2x1
jax: 0.10.0
libtpu: 0.0.40
codegen_flags: <defaults>
</compile_context>

<pallas_src>
import functools

import jax
import jax.numpy as jnp
from jax.experimental import pallas as pl
from jax.experimental.pallas import tpu as pltpu

# ---- small-but-consistent shapes -------------------------------------------
B, T, H = 2, 8, 32          # batch, seq, hidden
N_HEADS, D_HEAD = 4, 8      # H == N_HEADS * D_HEAD
FFN = 64
N_LAYERS = 2
VOCAB = 100
TYPE_VOCAB = 2
EPS = 1e-12                 # BERT LayerNorm eps
M = B * T                   # flattened token count


# ---- in-kernel helpers (pure value -> value, traced inside the kernel) ------
def _layer_norm(x, g, b):
    # f32 epilogue on purpose (v5e VPU has no bf16; variance needs f32).
    mu = jnp.mean(x, axis=-1, keepdims=True)
    var = jnp.mean((x - mu) ** 2, axis=-1, keepdims=True)
    return (x - mu) * jax.lax.rsqrt(var + EPS) * g + b


def _gelu(x):
    # TODO(synk): exact erf-GELU to bit-match HF BERT; tanh approximation here.
    c = 0.7978845608028654  # sqrt(2/pi)
    return 0.5 * x * (1.0 + jnp.tanh(c * (x + 0.044715 * x * x * x)))


def _const_spec(shape):
    """BlockSpec covering the whole array with a constant block index.

    Constant index across grid steps -> the block stays resident in VMEM
    (weights are not re-DMA'd per batch tile)."""
    zeros = (0,) * len(shape)
    return pl.BlockSpec(shape, lambda b, _z=zeros: _z)


# ---- Pallas kernel: one full BERT encoder layer per call --------------------
def _encoder_layer_kernel(*refs, apply_input_ln):
    """Fused QKV -> all-heads attention -> out proj -> Add&LN -> FFN -> Add&LN.

    Runs once per batch element (grid=(B,)); all intermediates stay in VMEM.
    Layer 0 additionally applies the embedding LayerNorm (no standalone call).
    """
    if apply_input_ln:
        (h_ref, mask_ref, ln0_g_ref, ln0_b_ref,
         wqkv_ref, bqkv_ref, wo_ref, bo_ref, ln1_g_ref, ln1_b_ref,
         w1_ref, b1_ref, w2_ref, b2_ref, ln2_g_ref, ln2_b_ref, o_ref) = refs
    else:
        (h_ref, mask_ref,
         wqkv_ref, bqkv_ref, wo_ref, bo_ref, ln1_g_ref, ln1_b_ref,
         w1_ref, b1_ref, w2_ref, b2_ref, ln2_g_ref, ln2_b_ref, o_ref) = refs

    x = h_ref[...]                                        # (T, H) f32
    if apply_input_ln:
        # Embedding LayerNorm fused into layer 0.
        x = _layer_norm(x, ln0_g_ref[...], ln0_b_ref[...])

    # ---- fused QKV projection: bf16 operands, f32 accumulation --------------
    qkv = jnp.dot(x.astype(jnp.bfloat16), wqkv_ref[...],
                  preferred_element_type=jnp.float32) + bqkv_ref[...]   # (T, 3H)

    # ---- attention: mask broadcast hoisted ONCE out of the head loop --------
    mask_b = jnp.broadcast_to(mask_ref[0], (T, T))        # (T, T) f32 additive bias
    scale = 1.0 / (float(D_HEAD) ** 0.5)

    head_ctx = []
    for hd in range(N_HEADS):                             # static unroll, 2-D tiles,
        lo = hd * D_HEAD                                  # no reshapes / transposes
        q = qkv[:, lo:lo + D_HEAD]                        # (T, D) static lane slice
        k = qkv[:, H + lo:H + lo + D_HEAD]
        v = qkv[:, 2 * H + lo:2 * H + lo + D_HEAD]
        s = jnp.einsum("qd,kd->qk", q.astype(jnp.bfloat16), k.astype(jnp.bfloat16),
                       preferred_element_type=jnp.float32) * scale      # (T, T) f32
        s = s + mask_b                                    # mask/softmax kept in f32
        s = s - jnp.max(s, axis=-1, keepdims=True)
        p = jnp.exp(s)
        p = p * pl.reciprocal(jnp.sum(p, axis=-1, keepdims=True), approx=True)
        head_ctx.append(jnp.dot(p.astype(jnp.bfloat16), v.astype(jnp.bfloat16),
                                preferred_element_type=jnp.float32))    # (T, D)
    ctx = jnp.concatenate(head_ctx, axis=-1)              # (T, H) f32

    # ---- output projection + Add & LayerNorm ---------------------------------
    attn = jnp.dot(ctx.astype(jnp.bfloat16), wo_ref[...],
                   preferred_element_type=jnp.float32) + bo_ref[...]
    h1 = _layer_norm(attn + x, ln1_g_ref[...], ln1_b_ref[...])

    # ---- FFN (GELU) + Add & LayerNorm ----------------------------------------
    f = jnp.dot(h1.astype(jnp.bfloat16), w1_ref[...],
                preferred_element_type=jnp.float32) + b1_ref[...]
    f = _gelu(f)
    f = jnp.dot(f.astype(jnp.bfloat16), w2_ref[...],
                preferred_element_type=jnp.float32) + b2_ref[...]
    o_ref[...] = _layer_norm(f + h1, ln2_g_ref[...], ln2_b_ref[...])


# ---- cost estimate ----------------------------------------------------------
def _layer_cost(apply_input_ln):
    flops = (2 * M * H * 3 * H                    # fused QKV
             + 4 * B * N_HEADS * T * T * D_HEAD   # attention scores + ctx
             + 2 * M * H * H                      # output proj
             + 2 * M * H * FFN                    # FFN up
             + 2 * M * FFN * H)                   # FFN down
    transcendentals = M * FFN + B * N_HEADS * T * T     # tanh + exp
    bytes_accessed = (4 * 2 * M * H                               # activations in/out
                      + 4 * B * T                                 # mask
                      + 2 * (3 * H * H + H * H + 2 * H * FFN)     # bf16 weights
                      + 4 * (3 * H + H + FFN + H + 4 * H))        # biases + LN params
    if apply_input_ln:
        bytes_accessed += 4 * 2 * H
    return pl.CostEstimate(flops=flops, transcendentals=transcendentals,
                           bytes_accessed=bytes_accessed)


# ---- pallas_call wrapper -----------------------------------------------------
def encoder_layer(h, mask_bias, lp, emb_ln=None):
    apply_input_ln = emb_ln is not None

    arrays = [h, mask_bias]
    specs = [pl.BlockSpec((T, H), lambda b: (b, 0)),         # per-batch activation tile
             pl.BlockSpec((1, 1, T), lambda b: (b, 0, 0))]   # per-batch additive mask

    if apply_input_ln:
        arrays += [emb_ln[0].reshape(1, H), emb_ln[1].reshape(1, H)]
        specs += [_const_spec((1, H)), _const_spec((1, H))]

    wparams = [
        lp["wqkv"], lp["bqkv"].reshape(1, 3 * H),            # wqkv/wo/w1/w2 are bf16
        lp["wo"], lp["bo"].reshape(1, H),
        lp["ln1_g"].reshape(1, H), lp["ln1_b"].reshape(1, H),
        lp["w1"], lp["b1"].reshape(1, FFN),
        lp["w2"], lp["b2"].reshape(1, H),
        lp["ln2_g"].reshape(1, H), lp["ln2_b"].reshape(1, H),
    ]
    arrays += wparams
    specs += [_const_spec(tuple(a.shape)) for a in wparams]

    # TODO(synk): at real scale also tile M/K, set vmem_limit_bytes explicitly,
    # and pipeline / prefetch the ~14 MB bf16 per-layer weights.
    return pl.pallas_call(
        functools.partial(_encoder_layer_kernel, apply_input_ln=apply_input_ln),
        out_shape=jax.ShapeDtypeStruct((M, H), jnp.float32),
        grid=(B,),
        in_specs=specs,
        out_specs=pl.BlockSpec((T, H), lambda b: (b, 0)),
        compiler_params=pltpu.CompilerParams(dimension_semantics=("parallel",)),
        cost_estimate=_layer_cost(apply_input_ln),
    )(*arrays)


# ---- parameter construction (deterministic, synthetic) ----------------------
def init_params(key):
    def nrm(k, shape, scale=0.02, dtype=jnp.float32):
        return (scale * jax.random.normal(k, shape, dtype=jnp.float32)).astype(dtype)

    keys = iter(jax.random.split(key, 8 + N_LAYERS * 8))
    params = {
        "word_emb": nrm(next(keys), (VOCAB, H)),
        "pos_emb": nrm(next(keys), (T, H)),
        "type_emb": nrm(next(keys), (TYPE_VOCAB, H)),
        "emb_ln_g": jnp.ones((H,), jnp.float32),
        "emb_ln_b": jnp.zeros((H,), jnp.float32),
        "cls_w": nrm(next(keys), (H, 1)),
        "cls_b": jnp.zeros((1,), jnp.float32),
        "layers": [],
    }
    for _ in range(N_LAYERS):
        lp = {
            # Matmul weights stored in bf16 (MXU-native operands, half the HBM
            # DMA bytes).  Biases / LN params stay f32.
            "wqkv": nrm(next(keys), (H, 3 * H), dtype=jnp.bfloat16),   # [wq | wk | wv]
            "bqkv": jnp.zeros((3 * H,), jnp.float32),
            "wo": nrm(next(keys), (H, H), dtype=jnp.bfloat16),
            "bo": jnp.zeros((H,), jnp.float32),
            "ln1_g": jnp.ones((H,), jnp.float32), "ln1_b": jnp.zeros((H,), jnp.float32),
            "w1": nrm(next(keys), (H, FFN), dtype=jnp.bfloat16),
            "b1": jnp.zeros((FFN,), jnp.float32),
            "w2": nrm(next(keys), (FFN, H), dtype=jnp.bfloat16),
            "b2": jnp.zeros((H,), jnp.float32),
            "ln2_g": jnp.ones((H,), jnp.float32), "ln2_b": jnp.zeros((H,), jnp.float32),
        }
        params["layers"].append(lp)
    return params


# ---- forward pass (mirrors BertRegressor.forward) ---------------------------
def bert_regressor(params, seq, attn_masks):
    # Embedding gathers stay in plain JAX glue.
    # token_type_ids default to all-zeros (matches HF default when not passed).
    we = params["word_emb"][seq]                          # (B, T, H)
    pe = params["pos_emb"][None, :, :]                    # (1, T, H)
    te = params["type_emb"][0][None, None, :]             # (1, 1, H)
    emb = (we + pe + te).reshape(M, H).astype(jnp.float32)

    # Additive attention-mask bias: 0 for real tokens, -1e9 for PAD. (B, 1, T), f32.
    mask_bias = ((1.0 - attn_masks.astype(jnp.float32)) * -1e9)[:, None, :]

    h = emb
    for li, lp in enumerate(params["layers"]):
        emb_ln = (params["emb_ln_g"], params["emb_ln_b"]) if li == 0 else None
        h = encoder_layer(h, mask_bias, lp, emb_ln=emb_ln)

    # CLS regression head in plain JAX: avoids a 1-lane masked (B, 1) store
    # inside the fused kernel (lane-dense out_spec feedback).
    cls = h.reshape(B, T, H)[:, 0, :]                     # (B, H)
    scores = cls @ params["cls_w"] + params["cls_b"]      # (B, 1)
    return scores


if __name__ == "__main__":
    key = jax.random.PRNGKey(0)
    k_param, k_seq, k_mask = jax.random.split(key, 3)

    params = init_params(k_param)
    seq = jax.random.randint(k_seq, (B, T), 0, VOCAB, dtype=jnp.int32)
    # attention mask: ones with a couple of trailing PAD positions in batch 1
    attn_masks = jnp.ones((B, T), dtype=jnp.int32).at[1, T - 2:].set(0)

    scores = bert_regressor(params, seq, attn_masks)
    scores = jax.block_until_ready(scores)
    assert scores.shape == (B, 1) and scores.dtype == jnp.float32
    print("KERNEL_OK")
</pallas_src>

<mosaic_0001>
module attributes {stable_mosaic.version = 11 : i64} {
  func.func @_encoder_layer_kernel(%arg0: i32, %arg1: memref<8x32xf32, #tpu.memory_space<vmem>>, %arg2: memref<1x1x8xf32, #tpu.memory_space<vmem>>, %arg3: memref<1x32xf32, #tpu.memory_space<vmem>>, %arg4: memref<1x32xf32, #tpu.memory_space<vmem>>, %arg5: memref<32x96xbf16, #tpu.memory_space<vmem>>, %arg6: memref<1x96xf32, #tpu.memory_space<vmem>>, %arg7: memref<32x32xbf16, #tpu.memory_space<vmem>>, %arg8: memref<1x32xf32, #tpu.memory_space<vmem>>, %arg9: memref<1x32xf32, #tpu.memory_space<vmem>>, %arg10: memref<1x32xf32, #tpu.memory_space<vmem>>, %arg11: memref<32x64xbf16, #tpu.memory_space<vmem>>, %arg12: memref<1x64xf32, #tpu.memory_space<vmem>>, %arg13: memref<64x32xbf16, #tpu.memory_space<vmem>>, %arg14: memref<1x32xf32, #tpu.memory_space<vmem>>, %arg15: memref<1x32xf32, #tpu.memory_space<vmem>>, %arg16: memref<1x32xf32, #tpu.memory_space<vmem>>, %arg17: memref<8x32xf32, #tpu.memory_space<vmem>>) attributes {dimension_semantics = [#tpu.dimension_semantics<parallel>], iteration_bounds = array<i64: 2>, scalar_prefetch = 0 : i64, scratch_operands = 0 : i64, tpu.core_type = #tpu.core_type<tc>, window_params = [{transform_indices = @transform_0, window_bounds = array<i64: 8, 32>}, {transform_indices = @transform_1, window_bounds = array<i64: 1, 1, 8>}, {pipeline_mode = #tpu.pipeline_mode<synchronous>, transform_indices = @transform_2, window_bounds = array<i64: 1, 32>}, {pipeline_mode = #tpu.pipeline_mode<synchronous>, transform_indices = @transform_3, window_bounds = array<i64: 1, 32>}, {pipeline_mode = #tpu.pipeline_mode<synchronous>, transform_indices = @transform_4, window_bounds = array<i64: 32, 96>}, {pipeline_mode = #tpu.pipeline_mode<synchronous>, transform_indices = @transform_5, window_bounds = array<i64: 1, 96>}, {pipeline_mode = #tpu.pipeline_mode<synchronous>, transform_indices = @transform_6, window_bounds = array<i64: 32, 32>}, {pipeline_mode = #tpu.pipeline_mode<synchronous>, transform_indices = @transform_7, window_bounds = array<i64: 1, 32>}, {pipeline_mode = #tpu.pipeline_mode<synchronous>, transform_indices = @transform_8, window_bounds = array<i64: 1, 32>}, {pipeline_mode = #tpu.pipeline_mode<synchronous>, transform_indices = @transform_9, window_bounds = array<i64: 1, 32>}, {pipeline_mode = #tpu.pipeline_mode<synchronous>, transform_indices = @transform_10, window_bounds = array<i64: 32, 64>}, {pipeline_mode = #tpu.pipeline_mode<synchronous>, transform_indices = @transform_11, window_bounds = array<i64: 1, 64>}, {pipeline_mode = #tpu.pipeline_mode<synchronous>, transform_indices = @transform_12, window_bounds = array<i64: 64, 32>}, {pipeline_mode = #tpu.pipeline_mode<synchronous>, transform_indices = @transform_13, window_bounds = array<i64: 1, 32>}, {pipeline_mode = #tpu.pipeline_mode<synchronous>, transform_indices = @transform_14, window_bounds = array<i64: 1, 32>}, {pipeline_mode = #tpu.pipeline_mode<synchronous>, transform_indices = @transform_15, window_bounds = array<i64: 1, 32>}, {transform_indices = @transform_16, window_bounds = array<i64: 8, 32>}]} {
    %c0 = arith.constant 0 : index
    %c0_0 = arith.constant 0 : index
    %0 = vector.load %arg1[%c0, %c0_0] : memref<8x32xf32, #tpu.memory_space<vmem>>, vector<8x32xf32>
    %c0_1 = arith.constant 0 : index
    %c0_2 = arith.constant 0 : index
    %1 = vector.load %arg3[%c0_1, %c0_2] : memref<1x32xf32, #tpu.memory_space<vmem>>, vector<1x32xf32>
    %c0_3 = arith.constant 0 : index
    %c0_4 = arith.constant 0 : index
    %2 = vector.load %arg4[%c0_3, %c0_4] : memref<1x32xf32, #tpu.memory_space<vmem>>, vector<1x32xf32>
    %cst = arith.constant dense<0.000000e+00> : vector<8xf32>
    %3 = vector.multi_reduction <add>, %0, %cst [1] : vector<8x32xf32> to vector<8xf32>
    %4 = vector.shape_cast %3 : vector<8xf32> to vector<8x1xf32>
    %cst_5 = arith.constant 3.200000e+01 : f32
    %5 = vector.broadcast %cst_5 : f32 to vector<8x1xf32>
    %6 = arith.divf %4, %5 : vector<8x1xf32>
    %7 = vector.broadcast %6 : vector<8x1xf32> to vector<8x32xf32>
    %8 = arith.subf %0, %7 : vector<8x32xf32>
    %9 = arith.mulf %8, %8 : vector<8x32xf32>
    %cst_6 = arith.constant dense<0.000000e+00> : vector<8xf32>
    %10 = vector.multi_reduction <add>, %9, %cst_6 [1] : vector<8x32xf32> to vector<8xf32>
    %11 = vector.shape_cast %10 : vector<8xf32> to vector<8x1xf32>
    %cst_7 = arith.constant 3.200000e+01 : f32
    %12 = vector.broadcast %cst_7 : f32 to vector<8x1xf32>
    %13 = arith.divf %11, %12 : vector<8x1xf32>
    %14 = vector.broadcast %6 : vector<8x1xf32> to vector<8x32xf32>
    %15 = arith.subf %0, %14 : vector<8x32xf32>
    %cst_8 = arith.constant 9.99999996E-13 : f32
    %16 = vector.broadcast %cst_8 : f32 to vector<8x1xf32>
    %17 = arith.addf %13, %16 : vector<8x1xf32>
    %18 = math.rsqrt %17 : vector<8x1xf32>
    %19 = vector.broadcast %18 : vector<8x1xf32> to vector<8x32xf32>
    %20 = arith.mulf %15, %19 : vector<8x32xf32>
    %21 = vector.broadcast %1 : vector<1x32xf32> to vector<8x32xf32>
    %22 = arith.mulf %20, %21 : vector<8x32xf32>
    %23 = vector.broadcast %2 : vector<1x32xf32> to vector<8x32xf32>
    %24 = arith.addf %22, %23 : vector<8x32xf32>
    %25 = arith.truncf %24 : vector<8x32xf32> to vector<8x32xbf16>
    %c0_9 = arith.constant 0 : index
    %c0_10 = arith.constant 0 : index
    %26 = vector.load %arg5[%c0_9, %c0_10] : memref<32x96xbf16, #tpu.memory_space<vmem>>, vector<32x96xbf16>
    %cst_11 = arith.constant dense<0.000000e+00> : vector<8x96xf32>
    %27 = tpu.matmul %25, %26, %cst_11 {dimension_numbers = #tpu.dot_dimension_numbers<[1], [0], [0], [1], [0, 0, 1, 1], [], []>} : vector<8x32xbf16>, vector<32x96xbf16>, vector<8x96xf32> -> vector<8x96xf32>
    %c0_12 = arith.constant 0 : index
    %c0_13 = arith.constant 0 : index
    %28 = vector.load %arg6[%c0_12, %c0_13] : memref<1x96xf32, #tpu.memory_space<vmem>>, vector<1x96xf32>
    %29 = vector.broadcast %28 : vector<1x96xf32> to vector<8x96xf32>
    %30 = arith.addf %27, %29 : vector<8x96xf32>
    %c0_14 = arith.constant 0 : index
    %c0_15 = arith.constant 0 : index
    %c0_16 = arith.constant 0 : index
    %31 = vector.load %arg2[%c0_14, %c0_15, %c0_16] : memref<1x1x8xf32, #tpu.memory_space<vmem>>, vector<1x1x8xf32>
    %32 = vector.shape_cast %31 : vector<1x1x8xf32> to vector<1x8xf32>
    %33 = vector.shape_cast %32 : vector<1x8xf32> to vector<1x8xf32>
    %34 = vector.broadcast %33 : vector<1x8xf32> to vector<8x8xf32>
    %35 = vector.extract_strided_slice %30 {offsets = [0, 0], sizes = [8, 8], strides = [1, 1]} : vector<8x96xf32> to vector<8x8xf32>
    %36 = vector.extract_strided_slice %30 {offsets = [0, 32], sizes = [8, 8], strides = [1, 1]} : vector<8x96xf32> to vector<8x8xf32>
    %37 = vector.extract_strided_slice %30 {offsets = [0, 64], sizes = [8, 8], strides = [1, 1]} : vector<8x96xf32> to vector<8x8xf32>
    %38 = arith.truncf %35 : vector<8x8xf32> to vector<8x8xbf16>
    %39 = arith.truncf %36 : vector<8x8xf32> to vector<8x8xbf16>
    "tpu.trace_start"() <{level = 10 : i32, message = "qd,kd->qk"}> : () -> ()
    %cst_17 = arith.constant dense<0.000000e+00> : vector<8x8xf32>
    %40 = tpu.matmul %38, %39, %cst_17 {dimension_numbers = #tpu.dot_dimension_numbers<[1], [1], [0], [0], [0, 0, 1, 0], [], []>} : vector<8x8xbf16>, vector<8x8xbf16>, vector<8x8xf32> -> vector<8x8xf32>
    "tpu.trace_stop"() : () -> ()
    %cst_18 = arith.constant 0.353553385 : f32
    %41 = vector.broadcast %cst_18 : f32 to vector<8x8xf32>
    %42 = arith.mulf %40, %41 : vector<8x8xf32>
    %43 = arith.addf %42, %34 : vector<8x8xf32>
    %cst_19 = arith.constant dense<0xFF800000> : vector<8xf32>
    %44 = vector.multi_reduction <maximumf>, %43, %cst_19 [1] : vector<8x8xf32> to vector<8xf32>
    %45 = vector.shape_cast %44 : vector<8xf32> to vector<8x1xf32>
    %46 = vector.broadcast %45 : vector<8x1xf32> to vector<8x8xf32>
    %47 = arith.subf %43, %46 : vector<8x8xf32>
    %48 = math.exp %47 : vector<8x8xf32>
    %cst_20 = arith.constant dense<0.000000e+00> : vector<8xf32>
    %49 = vector.multi_reduction <add>, %48, %cst_20 [1] : vector<8x8xf32> to vector<8xf32>
    %50 = vector.shape_cast %49 : vector<8xf32> to vector<8x1xf32>
    %51 = tpu.reciprocal %50 {approx = true} : vector<8x1xf32> -> vector<8x1xf32>
    %52 = vector.broadcast %51 : vector<8x1xf32> to vector<8x8xf32>
    %53 = arith.mulf %48, %52 : vector<8x8xf32>
    %54 = arith.truncf %53 : vector<8x8xf32> to vector<8x8xbf16>
    %55 = arith.truncf %37 : vector<8x8xf32> to vector<8x8xbf16>
    %cst_21 = arith.constant dense<0.000000e+00> : vector<8x8xf32>
    %56 = tpu.matmul %54, %55, %cst_21 {dimension_numbers = #tpu.dot_dimension_numbers<[1], [0], [0], [1], [0, 0, 1, 1], [], []>} : vector<8x8xbf16>, vector<8x8xbf16>, vector<8x8xf32> -> vector<8x8xf32>
    %57 = vector.extract_strided_slice %30 {offsets = [0, 8], sizes = [8, 8], strides = [1, 1]} : vector<8x96xf32> to vector<8x8xf32>
    %58 = vector.extract_strided_slice %30 {offsets = [0, 40], sizes = [8, 8], strides = [1, 1]} : vector<8x96xf32> to vector<8x8xf32>
    %59 = vector.extract_strided_slice %30 {offsets = [0, 72], sizes = [8, 8], strides = [1, 1]} : vector<8x96xf32> to vector<8x8xf32>
    %60 = arith.truncf %57 : vector<8x8xf32> to vector<8x8xbf16>
    %61 = arith.truncf %58 : vector<8x8xf32> to vector<8x8xbf16>
    "tpu.trace_start"() <{level = 10 : i32, message = "qd,kd->qk"}> : () -> ()
    %cst_22 = arith.constant dense<0.000000e+00> : vector<8x8xf32>
    %62 = tpu.matmul %60, %61, %cst_22 {dimension_numbers = #tpu.dot_dimension_numbers<[1], [1], [0], [0], [0, 0, 1, 0], [], []>} : vector<8x8xbf16>, vector<8x8xbf16>, vector<8x8xf32> -> vector<8x8xf32>
    "tpu.trace_stop"() : () -> ()
    %cst_23 = arith.constant 0.353553385 : f32
    %63 = vector.broadcast %cst_23 : f32 to vector<8x8xf32>
    %64 = arith.mulf %62, %63 : vector<8x8xf32>
    %65 = arith.addf %64, %34 : vector<8x8xf32>
    %cst_24 = arith.constant dense<0xFF800000> : vector<8xf32>
    %66 = vector.multi_reduction <maximumf>, %65, %cst_24 [1] : vector<8x8xf32> to vector<8xf32>
    %67 = vector.shape_cast %66 : vector<8xf32> to vector<8x1xf32>
    %68 = vector.broadcast %67 : vector<8x1xf32> to vector<8x8xf32>
    %69 = arith.subf %65, %68 : vector<8x8xf32>
    %70 = math.exp %69 : vector<8x8xf32>
    %cst_25 = arith.constant dense<0.000000e+00> : vector<8xf32>
    %71 = vector.multi_reduction <add>, %70, %cst_25 [1] : vector<8x8xf32> to vector<8xf32>
    %72 = vector.shape_cast %71 : vector<8xf32> to vector<8x1xf32>
    %73 = tpu.reciprocal %72 {approx = true} : vector<8x1xf32> -> vector<8x1xf32>
    %74 = vector.broadcast %73 : vector<8x1xf32> to vector<8x8xf32>
    %75 = arith.mulf %70, %74 : vector<8x8xf32>
    %76 = arith.truncf %75 : vector<8x8xf32> to vector<8x8xbf16>
    %77 = arith.truncf %59 : vector<8x8xf32> to vector<8x8xbf16>
    %cst_26 = arith.constant dense<0.000000e+00> : vector<8x8xf32>
    %78 = tpu.matmul %76, %77, %cst_26 {dimension_numbers = #tpu.dot_dimension_numbers<[1], [0], [0], [1], [0, 0, 1, 1], [], []>} : vector<8x8xbf16>, vector<8x8xbf16>, vector<8x8xf32> -> vector<8x8xf32>
    %79 = vector.extract_strided_slice %30 {offsets = [0, 16], sizes = [8, 8], strides = [1, 1]} : vector<8x96xf32> to vector<8x8xf32>
    %80 = vector.extract_strided_slice %30 {offsets = [0, 48], sizes = [8, 8], strides = [1, 1]} : vector<8x96xf32> to vector<8x8xf32>
    %81 = vector.extract_strided_slice %30 {offsets = [0, 80], sizes = [8, 8], strides = [1, 1]} : vector<8x96xf32> to vector<8x8xf32>
    %82 = arith.truncf %79 : vector<8x8xf32> to vector<8x8xbf16>
    %83 = arith.truncf %80 : vector<8x8xf32> to vector<8x8xbf16>
    "tpu.trace_start"() <{level = 10 : i32, message = "qd,kd->qk"}> : () -> ()
    %cst_27 = arith.constant dense<0.000000e+00> : vector<8x8xf32>
    %84 = tpu.matmul %82, %83, %cst_27 {dimension_numbers = #tpu.dot_dimension_numbers<[1], [1], [0], [0], [0, 0, 1, 0], [], []>} : vector<8x8xbf16>, vector<8x8xbf16>, vector<8x8xf32> -> vector<8x8xf32>
    "tpu.trace_stop"() : () -> ()
    %cst_28 = arith.constant 0.353553385 : f32
    %85 = vector.broadcast %cst_28 : f32 to vector<8x8xf32>
    %86 = arith.mulf %84, %85 : vector<8x8xf32>
    %87 = arith.addf %86, %34 : vector<8x8xf32>
    %cst_29 = arith.constant dense<0xFF800000> : vector<8xf32>
    %88 = vector.multi_reduction <maximumf>, %87, %cst_29 [1] : vector<8x8xf32> to vector<8xf32>
    %89 = vector.shape_cast %88 : vector<8xf32> to vector<8x1xf32>
    %90 = vector.broadcast %89 : vector<8x1xf32> to vector<8x8xf32>
    %91 = arith.subf %87, %90 : vector<8x8xf32>
    %92 = math.exp %91 : vector<8x8xf32>
    %cst_30 = arith.constant dense<0.000000e+00> : vector<8xf32>
    %93 = vector.multi_reduction <add>, %92, %cst_30 [1] : vector<8x8xf32> to vector<8xf32>
    %94 = vector.shape_cast %93 : vector<8xf32> to vector<8x1xf32>
    %95 = tpu.reciprocal %94 {approx = true} : vector<8x1xf32> -> vector<8x1xf32>
    %96 = vector.broadcast %95 : vector<8x1xf32> to vector<8x8xf32>
    %97 = arith.mulf %92, %96 : vector<8x8xf32>
    %98 = arith.truncf %97 : vector<8x8xf32> to vector<8x8xbf16>
    %99 = arith.truncf %81 : vector<8x8xf32> to vector<8x8xbf16>
    %cst_31 = arith.constant dense<0.000000e+00> : vector<8x8xf32>
    %100 = tpu.matmul %98, %99, %cst_31 {dimension_numbers = #tpu.dot_dimension_numbers<[1], [0], [0], [1], [0, 0, 1, 1], [], []>} : vector<8x8xbf16>, vector<8x8xbf16>, vector<8x8xf32> -> vector<8x8xf32>
    %101 = vector.extract_strided_slice %30 {offsets = [0, 24], sizes = [8, 8], strides = [1, 1]} : vector<8x96xf32> to vector<8x8xf32>
    %102 = vector.extract_strided_slice %30 {offsets = [0, 56], sizes = [8, 8], strides = [1, 1]} : vector<8x96xf32> to vector<8x8xf32>
    %103 = vector.extract_strided_slice %30 {offsets = [0, 88], sizes = [8, 8], strides = [1, 1]} : vector<8x96xf32> to vector<8x8xf32>
    %104 = arith.truncf %101 : vector<8x8xf32> to vector<8x8xbf16>
    %105 = arith.truncf %102 : vector<8x8xf32> to vector<8x8xbf16>
    "tpu.trace_start"() <{level = 10 : i32, message = "qd,kd->qk"}> : () -> ()
    %cst_32 = arith.constant dense<0.000000e+00> : vector<8x8xf32>
    %106 = tpu.matmul %104, %105, %cst_32 {dimension_numbers = #tpu.dot_dimension_numbers<[1], [1], [0], [0], [0, 0, 1, 0], [], []>} : vector<8x8xbf16>, vector<8x8xbf16>, vector<8x8xf32> -> vector<8x8xf32>
    "tpu.trace_stop"() : () -> ()
    %cst_33 = arith.constant 0.353553385 : f32
    %107 = vector.broadcast %cst_33 : f32 to vector<8x8xf32>
    %108 = arith.mulf %106, %107 : vector<8x8xf32>
    %109 = arith.addf %108, %34 : vector<8x8xf32>
    %cst_34 = arith.constant dense<0xFF800000> : vector<8xf32>
    %110 = vector.multi_reduction <maximumf>, %109, %cst_34 [1] : vector<8x8xf32> to vector<8xf32>
    %111 = vector.shape_cast %110 : vector<8xf32> to vector<8x1xf32>
    %112 = vector.broadcast %111 : vector<8x1xf32> to vector<8x8xf32>
    %113 = arith.subf %109, %112 : vector<8x8xf32>
    %114 = math.exp %113 : vector<8x8xf32>
    %cst_35 = arith.constant dense<0.000000e+00> : vector<8xf32>
    %115 = vector.multi_reduction <add>, %114, %cst_35 [1] : vector<8x8xf32> to vector<8xf32>
    %116 = vector.shape_cast %115 : vector<8xf32> to vector<8x1xf32>
    %117 = tpu.reciprocal %116 {approx = true} : vector<8x1xf32> -> vector<8x1xf32>
    %118 = vector.broadcast %117 : vector<8x1xf32> to vector<8x8xf32>
    %119 = arith.mulf %114, %118 : vector<8x8xf32>
    %120 = arith.truncf %119 : vector<8x8xf32> to vector<8x8xbf16>
    %121 = arith.truncf %103 : vector<8x8xf32> to vector<8x8xbf16>
    %cst_36 = arith.constant dense<0.000000e+00> : vector<8x8xf32>
    %122 = tpu.matmul %120, %121, %cst_36 {dimension_numbers = #tpu.dot_dimension_numbers<[1], [0], [0], [1], [0, 0, 1, 1], [], []>} : vector<8x8xbf16>, vector<8x8xbf16>, vector<8x8xf32> -> vector<8x8xf32>
    %123 = tpu.concatenate %56, %78, %100, %122 in 1 : vector<8x8xf32>, vector<8x8xf32>, vector<8x8xf32>, vector<8x8xf32> -> vector<8x32xf32>
    %124 = arith.truncf %123 : vector<8x32xf32> to vector<8x32xbf16>
    %c0_37 = arith.constant 0 : index
    %c0_38 = arith.constant 0 : index
    %125 = vector.load %arg7[%c0_37, %c0_38] : memref<32x32xbf16, #tpu.memory_space<vmem>>, vector<32x32xbf16>
    %cst_39 = arith.constant dense<0.000000e+00> : vector<8x32xf32>
    %126 = tpu.matmul %124, %125, %cst_39 {dimension_numbers = #tpu.dot_dimension_numbers<[1], [0], [0], [1], [0, 0, 1, 1], [], []>} : vector<8x32xbf16>, vector<32x32xbf16>, vector<8x32xf32> -> vector<8x32xf32>
    %c0_40 = arith.constant 0 : index
    %c0_41 = arith.constant 0 : index
    %127 = vector.load %arg8[%c0_40, %c0_41] : memref<1x32xf32, #tpu.memory_space<vmem>>, vector<1x32xf32>
    %128 = vector.broadcast %127 : vector<1x32xf32> to vector<8x32xf32>
    %129 = arith.addf %126, %128 : vector<8x32xf32>
    %130 = arith.addf %129, %24 : vector<8x32xf32>
    %c0_42 = arith.constant 0 : index
    %c0_43 = arith.constant 0 : index
    %131 = vector.load %arg9[%c0_42, %c0_43] : memref<1x32xf32, #tpu.memory_space<vmem>>, vector<1x32xf32>
    %c0_44 = arith.constant 0 : index
    %c0_45 = arith.constant 0 : index
    %132 = vector.load %arg10[%c0_44, %c0_45] : memref<1x32xf32, #tpu.memory_space<vmem>>, vector<1x32xf32>
    %cst_46 = arith.constant dense<0.000000e+00> : vector<8xf32>
    %133 = vector.multi_reduction <add>, %130, %cst_46 [1] : vector<8x32xf32> to vector<8xf32>
    %134 = vector.shape_cast %133 : vector<8xf32> to vector<8x1xf32>
    %cst_47 = arith.constant 3.200000e+01 : f32
    %135 = vector.broadcast %cst_47 : f32 to vector<8x1xf32>
    %136 = arith.divf %134, %135 : vector<8x1xf32>
    %137 = vector.broadcast %136 : vector<8x1xf32> to vector<8x32xf32>
    %138 = arith.subf %130, %137 : vector<8x32xf32>
    %139 = arith.mulf %138, %138 : vector<8x32xf32>
    %cst_48 = arith.constant dense<0.000000e+00> : vector<8xf32>
    %140 = vector.multi_reduction <add>, %139, %cst_48 [1] : vector<8x32xf32> to vector<8xf32>
    %141 = vector.shape_cast %140 : vector<8xf32> to vector<8x1xf32>
    %cst_49 = arith.constant 3.200000e+01 : f32
    %142 = vector.broadcast %cst_49 : f32 to vector<8x1xf32>
    %143 = arith.divf %141, %142 : vector<8x1xf32>
    %144 = vector.broadcast %136 : vector<8x1xf32> to vector<8x32xf32>
    %145 = arith.subf %130, %144 : vector<8x32xf32>
    %cst_50 = arith.constant 9.99999996E-13 : f32
    %146 = vector.broadcast %cst_50 : f32 to vector<8x1xf32>
    %147 = arith.addf %143, %146 : vector<8x1xf32>
    %148 = math.rsqrt %147 : vector<8x1xf32>
    %149 = vector.broadcast %148 : vector<8x1xf32> to vector<8x32xf32>
    %150 = arith.mulf %145, %149 : vector<8x32xf32>
    %151 = vector.broadcast %131 : vector<1x32xf32> to vector<8x32xf32>
    %152 = arith.mulf %150, %151 : vector<8x32xf32>
    %153 = vector.broadcast %132 : vector<1x32xf32> to vector<8x32xf32>
    %154 = arith.addf %152, %153 : vector<8x32xf32>
    %155 = arith.truncf %154 : vector<8x32xf32> to vector<8x32xbf16>
    %c0_51 = arith.constant 0 : index
    %c0_52 = arith.constant 0 : index
    %156 = vector.load %arg11[%c0_51, %c0_52] : memref<32x64xbf16, #tpu.memory_space<vmem>>, vector<32x64xbf16>
    %cst_53 = arith.constant dense<0.000000e+00> : vector<8x64xf32>
    %157 = tpu.matmul %155, %156, %cst_53 {dimension_numbers = #tpu.dot_dimension_numbers<[1], [0], [0], [1], [0, 0, 1, 1], [], []>} : vector<8x32xbf16>, vector<32x64xbf16>, vector<8x64xf32> -> vector<8x64xf32>
    %c0_54 = arith.constant 0 : index
    %c0_55 = arith.constant 0 : index
    %158 = vector.load %arg12[%c0_54, %c0_55] : memref<1x64xf32, #tpu.memory_space<vmem>>, vector<1x64xf32>
    %159 = vector.broadcast %158 : vector<1x64xf32> to vector<8x64xf32>
    %160 = arith.addf %157, %159 : vector<8x64xf32>
    %cst_56 = arith.constant 5.000000e-01 : f32
    %161 = vector.broadcast %cst_56 : f32 to vector<8x64xf32>
    %162 = arith.mulf %161, %160 : vector<8x64xf32>
    %cst_57 = arith.constant 4.471500e-02 : f32
    %163 = vector.broadcast %cst_57 : f32 to vector<8x64xf32>
    %164 = arith.mulf %163, %160 : vector<8x64xf32>
    %165 = arith.mulf %164, %160 : vector<8x64xf32>
    %166 = arith.mulf %165, %160 : vector<8x64xf32>
    %167 = arith.addf %160, %166 : vector<8x64xf32>
    %cst_58 = arith.constant 0.797884583 : f32
    %168 = vector.broadcast %cst_58 : f32 to vector<8x64xf32>
    %169 = arith.mulf %168, %167 : vector<8x64xf32>
    %170 = math.tanh %169 : vector<8x64xf32>
    %cst_59 = arith.constant 1.000000e+00 : f32
    %171 = vector.broadcast %cst_59 : f32 to vector<8x64xf32>
    %172 = arith.addf %171, %170 : vector<8x64xf32>
    %173 = arith.mulf %162, %172 : vector<8x64xf32>
    %174 = arith.truncf %173 : vector<8x64xf32> to vector<8x64xbf16>
    %c0_60 = arith.constant 0 : index
    %c0_61 = arith.constant 0 : index
    %175 = vector.load %arg13[%c0_60, %c0_61] : memref<64x32xbf16, #tpu.memory_space<vmem>>, vector<64x32xbf16>
    %cst_62 = arith.constant dense<0.000000e+00> : vector<8x32xf32>
    %176 = tpu.matmul %174, %175, %cst_62 {dimension_numbers = #tpu.dot_dimension_numbers<[1], [0], [0], [1], [0, 0, 1, 1], [], []>} : vector<8x64xbf16>, vector<64x32xbf16>, vector<8x32xf32> -> vector<8x32xf32>
    %c0_63 = arith.constant 0 : index
    %c0_64 = arith.constant 0 : index
    %177 = vector.load %arg14[%c0_63, %c0_64] : memref<1x32xf32, #tpu.memory_space<vmem>>, vector<1x32xf32>
    %178 = vector.broadcast %177 : vector<1x32xf32> to vector<8x32xf32>
    %179 = arith.addf %176, %178 : vector<8x32xf32>
    %180 = arith.addf %179, %154 : vector<8x32xf32>
    %c0_65 = arith.constant 0 : index
    %c0_66 = arith.constant 0 : index
    %181 = vector.load %arg15[%c0_65, %c0_66] : memref<1x32xf32, #tpu.memory_space<vmem>>, vector<1x32xf32>
    %c0_67 = arith.constant 0 : index
    %c0_68 = arith.constant 0 : index
    %182 = vector.load %arg16[%c0_67, %c0_68] : memref<1x32xf32, #tpu.memory_space<vmem>>, vector<1x32xf32>
    %cst_69 = arith.constant dense<0.000000e+00> : vector<8xf32>
    %183 = vector.multi_reduction <add>, %180, %cst_69 [1] : vector<8x32xf32> to vector<8xf32>
    %184 = vector.shape_cast %183 : vector<8xf32> to vector<8x1xf32>
    %cst_70 = arith.constant 3.200000e+01 : f32
    %185 = vector.broadcast %cst_70 : f32 to vector<8x1xf32>
    %186 = arith.divf %184, %185 : vector<8x1xf32>
    %187 = vector.broadcast %186 : vector<8x1xf32> to vector<8x32xf32>
    %188 = arith.subf %180, %187 : vector<8x32xf32>
    %189 = arith.mulf %188, %188 : vector<8x32xf32>
    %cst_71 = arith.constant dense<0.000000e+00> : vector<8xf32>
    %190 = vector.multi_reduction <add>, %189, %cst_71 [1] : vector<8x32xf32> to vector<8xf32>
    %191 = vector.shape_cast %190 : vector<8xf32> to vector<8x1xf32>
    %cst_72 = arith.constant 3.200000e+01 : f32
    %192 = vector.broadcast %cst_72 : f32 to vector<8x1xf32>
    %193 = arith.divf %191, %192 : vector<8x1xf32>
    %194 = vector.broadcast %186 : vector<8x1xf32> to vector<8x32xf32>
    %195 = arith.subf %180, %194 : vector<8x32xf32>
    %cst_73 = arith.constant 9.99999996E-13 : f32
    %196 = vector.broadcast %cst_73 : f32 to vector<8x1xf32>
    %197 = arith.addf %193, %196 : vector<8x1xf32>
    %198 = math.rsqrt %197 : vector<8x1xf32>
    %199 = vector.broadcast %198 : vector<8x1xf32> to vector<8x32xf32>
    %200 = arith.mulf %195, %199 : vector<8x32xf32>
    %201 = vector.broadcast %181 : vector<1x32xf32> to vector<8x32xf32>
    %202 = arith.mulf %200, %201 : vector<8x32xf32>
    %203 = vector.broadcast %182 : vector<1x32xf32> to vector<8x32xf32>
    %204 = arith.addf %202, %203 : vector<8x32xf32>
    %c0_74 = arith.constant 0 : index
    %c0_75 = arith.constant 0 : index
    %205 = vector.load %arg17[%c0_74, %c0_75] : memref<8x32xf32, #tpu.memory_space<vmem>>, vector<8x32xf32>
    tpu.vector_store %arg17[%c0_74, %c0_75], %204 {strides = array<i32>} : memref<8x32xf32, #tpu.memory_space<vmem>>, vector<8x32xf32>,
    return
  }
  func.func @transform_0(%arg0: i32) -> (i32, i32) {
    %c0_i32 = arith.constant 0 : i32
    %c0_i32_0 = arith.constant 0 : i32
    return %arg0, %c0_i32 : i32, i32
  }
  func.func @transform_1(%arg0: i32) -> (i32, i32, i32) {
    %c0_i32 = arith.constant 0 : i32
    %c0_i32_0 = arith.constant 0 : i32
    %c0_i32_1 = arith.constant 0 : i32
    return %arg0, %c0_i32, %c0_i32_0 : i32, i32, i32
  }
  func.func @transform_2(%arg0: i32) -> (i32, i32) {
    %c0_i32 = arith.constant 0 : i32
    %c0_i32_0 = arith.constant 0 : i32
    %c0_i32_1 = arith.constant 0 : i32
    return %c0_i32, %c0_i32_0 : i32, i32
  }
  func.func @transform_3(%arg0: i32) -> (i32, i32) {
    %c0_i32 = arith.constant 0 : i32
    %c0_i32_0 = arith.constant 0 : i32
    %c0_i32_1 = arith.constant 0 : i32
    return %c0_i32, %c0_i32_0 : i32, i32
  }
  func.func @transform_4(%arg0: i32) -> (i32, i32) {
    %c0_i32 = arith.constant 0 : i32
    %c0_i32_0 = arith.constant 0 : i32
    %c0_i32_1 = arith.constant 0 : i32
    return %c0_i32, %c0_i32_0 : i32, i32
  }
  func.func @transform_5(%arg0: i32) -> (i32, i32) {
    %c0_i32 = arith.constant 0 : i32
    %c0_i32_0 = arith.constant 0 : i32
    %c0_i32_1 = arith.constant 0 : i32
    return %c0_i32, %c0_i32_0 : i32, i32
  }
  func.func @transform_6(%arg0: i32) -> (i32, i32) {
    %c0_i32 = arith.constant 0 : i32
    %c0_i32_0 = arith.constant 0 : i32
    %c0_i32_1 = arith.constant 0 : i32
    return %c0_i32, %c0_i32_0 : i32, i32
  }
  func.func @transform_7(%arg0: i32) -> (i32, i32) {
    %c0_i32 = arith.constant 0 : i32
    %c0_i32_0 = arith.constant 0 : i32
    %c0_i32_1 = arith.constant 0 : i32
    return %c0_i32, %c0_i32_0 : i32, i32
  }
  func.func @transform_8(%arg0: i32) -> (i32, i32) {
    %c0_i32 = arith.constant 0 : i32
    %c0_i32_0 = arith.constant 0 : i32
    %c0_i32_1 = arith.constant 0 : i32
    return %c0_i32, %c0_i32_0 : i32, i32
  }
  func.func @transform_9(%arg0: i32) -> (i32, i32) {
    %c0_i32 = arith.constant 0 : i32
    %c0_i32_0 = arith.constant 0 : i32
    %c0_i32_1 = arith.constant 0 : i32
    return %c0_i32, %c0_i32_0 : i32, i32
  }
  func.func @transform_10(%arg0: i32) -> (i32, i32) {
    %c0_i32 = arith.constant 0 : i32
    %c0_i32_0 = arith.constant 0 : i32
    %c0_i32_1 = arith.constant 0 : i32
    return %c0_i32, %c0_i32_0 : i32, i32
  }
  func.func @transform_11(%arg0: i32) -> (i32, i32) {
    %c0_i32 = arith.constant 0 : i32
    %c0_i32_0 = arith.constant 0 : i32
    %c0_i32_1 = arith.constant 0 : i32
    return %c0_i32, %c0_i32_0 : i32, i32
  }
  func.func @transform_12(%arg0: i32) -> (i32, i32) {
    %c0_i32 = arith.constant 0 : i32
    %c0_i32_0 = arith.constant 0 : i32
    %c0_i32_1 = arith.constant 0 : i32
    return %c0_i32, %c0_i32_0 : i32, i32
  }
  func.func @transform_13(%arg0: i32) -> (i32, i32) {
    %c0_i32 = arith.constant 0 : i32
    %c0_i32_0 = arith.constant 0 : i32
    %c0_i32_1 = arith.constant 0 : i32
    return %c0_i32, %c0_i32_0 : i32, i32
  }
  func.func @transform_14(%arg0: i32) -> (i32, i32) {
    %c0_i32 = arith.constant 0 : i32
    %c0_i32_0 = arith.constant 0 : i32
    %c0_i32_1 = arith.constant 0 : i32
    return %c0_i32, %c0_i32_0 : i32, i32
  }
  func.func @transform_15(%arg0: i32) -> (i32, i32) {
    %c0_i32 = arith.constant 0 : i32
    %c0_i32_0 = arith.constant 0 : i32
    %c0_i32_1 = arith.constant 0 : i32
    return %c0_i32, %c0_i32_0 : i32, i32
  }
  func.func @transform_16(%arg0: i32) -> (i32, i32) {
    %c0_i32 = arith.constant 0 : i32
    %c0_i32_0 = arith.constant 0 : i32
    return %arg0, %c0_i32 : i32, i32
  }
}

</mosaic_0001>

<llo_original>
// kernel: tpu_custom_call.1
$region0: #{tpu_custom_call.1}
  #allocation0 [shape = 'u32[]', space=smem, size = 0x4, offset = 0x4, fixed_abs, tag = 'smem constant byte address 0x4 - core index']
  #allocation1 [shape = 'u32[144,128]{1,0:T(1,128)}', space=vmem, size = 0x12000, scoped, tag = 'internal scratch']
  %s0 = inlined_call_operand.vmem [shape: f32[16,32], index: 0, kind: input, shape index: {}]
  %s1 = inlined_call_operand.vmem [shape: f32[2,1,8], index: 1, kind: input, shape index: {}]
  %s2 = inlined_call_operand.hbm [shape: f32[1,32], index: 2, kind: input, shape index: {}]
  %s3 = inlined_call_operand.hbm [shape: f32[1,32], index: 3, kind: input, shape index: {}]
  %s4 = inlined_call_operand.vmem [shape: bf16[32,96], index: 4, kind: input, shape index: {}]
  %s5 = inlined_call_operand.hbm [shape: f32[1,96], index: 5, kind: input, shape index: {}]
  %s6 = inlined_call_operand.vmem [shape: bf16[32,32], index: 6, kind: input, shape index: {}]
  %s7 = inlined_call_operand.hbm [shape: f32[1,32], index: 7, kind: input, shape index: {}]
  %s8 = inlined_call_operand.hbm [shape: f32[1,32], index: 8, kind: input, shape index: {}]
  %s9 = inlined_call_operand.hbm [shape: f32[1,32], index: 9, kind: input, shape index: {}]
  %s10 = inlined_call_operand.vmem [shape: bf16[32,64], index: 10, kind: input, shape index: {}]
  %s11 = inlined_call_operand.vmem [shape: f32[1,64], index: 11, kind: input, shape index: {}]
  %s12 = inlined_call_operand.vmem [shape: bf16[64,32], index: 12, kind: input, shape index: {}]
  %s13 = inlined_call_operand.vmem [shape: f32[1,32], index: 13, kind: input, shape index: {}]
  %s14 = inlined_call_operand.vmem [shape: f32[1,32], index: 14, kind: input, shape index: {}]
  %s15 = inlined_call_operand.vmem [shape: f32[1,32], index: 15, kind: input, shape index: {}]
  %s16 = inlined_call_operand.hbm [shape: f32[16,32], index: 16, kind: output, shape index: {}]
  %s17 = sld [smem:[#allocation0]]
  $region121: #{tpu_custom_call.1} parent=0
    _
  %s19 = ssub.s32 1, %s17
  %s20 = scalar_select 0, %s19, %s17
  $region1: #{tpu_custom_call.1} parent=0
    #allocation2 [shape = 'u8[512]{0}', space=vmem, size = 0x400, scoped, tag = 'input window, operand 2, single buffered']
    #allocation3 [shape = 's32[2]{0}', space=sflag, size = 0x8, scoped, tag = 'scoped memory for tpu_custom_call.1']
    #allocation4 [shape = 's32[2]{0}', space=sflag, size = 0x8, scoped, tag = 'scoped memory for tpu_custom_call.1']
    #allocation5 [shape = 'u8[512]{0}', space=vmem, size = 0x400, scoped, tag = 'input window, operand 3, single buffered']
    #allocation6 [shape = 's32[1]{0}', space=sflag, size = 0x4, scoped, tag = 'scoped memory for tpu_custom_call.1']
    #allocation7 [shape = 'u8[512]{0}', space=vmem, size = 0x400, scoped, tag = 'input window, operand 5, single buffered']
    #allocation8 [shape = 'u8[512]{0}', space=vmem, size = 0x400, scoped, tag = 'input window, operand 7, single buffered']
    #allocation9 [shape = 's32[1]{0}', space=sflag, size = 0x4, scoped, tag = 'scoped memory for tpu_custom_call.1']
    #allocation10 [shape = 'u8[512]{0}', space=vmem, size = 0x400, scoped, tag = 'input window, operand 8, single buffered']
    #allocation11 [shape = 'u8[512]{0}', space=vmem, size = 0x400, scoped, tag = 'input window, operand 9, single buffered']
    #allocation12 [shape = 's32[1]{0}', space=sflag, size = 0x4, scoped, tag = 'scoped memory for tpu_custom_call.1']
    #allocation13 [shape = 'u8[8192]{0}', space=vmem, size = 0x2000, scoped, tag = 'output window, operand 0']
    %21 = vsyncpa [#allocation3], 0
    %22 = vsyncpa [#allocation6], 0
    %23 = vsyncpa [#allocation9], 0
    %24 = vsyncpa [#allocation12], 0
    %25 = vsyncpa [#allocation4], 0
    %s26 = scalar_lea.sflag [#allocation4], 1
    %27 = vsyncpa %s26, 0
    loop: start=0, step=1, limit=4
    $region2: #{tpu_custom_call.1} parent=1 // loop_pre_header
      _
    $region3: #{tpu_custom_call.1} parent=1 // loop_header
      %s29 = sphi 0, %s33
      %p30 = scmp.ge.s32.totalorder %s29, 4
      %s39 = sphi 0, %s41
      %s42 = sphi 0, %s39
      %s43 = sphi 0, %s42
      %s59 = sphi 0, %s43
      %s65 = sphi 0, %s67
      %s68 = sphi 0, %s65
      %s69 = sphi 0, %s68
      %s85 = sphi 0, %s69
      %s89 = sphi 0, %s89
      %s91 = sphi 0, %s89
      %s92 = sphi 0, %s91
      %s106 = sphi 0, %s92
      %s110 = sphi 0, %s110
      %s112 = sphi 0, %s110
      %s113 = sphi 0, %s112
      %s127 = sphi 0, %s113
      %s131 = sphi 0, %s131
      %s133 = sphi 0, %s131
      %s134 = sphi 0, %s133
      %s148 = sphi 0, %s134
      %s152 = sphi 0, %s152
      %s154 = sphi 0, %s152
      %s155 = sphi 0, %s154
      %s169 = sphi 0, %s155
      %s173 = sphi 0, %s173
      %s175 = sphi 0, %s173
      %s176 = sphi 0, %s175
      %s190 = sphi 0, %s176
      %s194 = sphi 0, %s194
      %s196 = sphi 0, %s194
      %s197 = sphi 0, %s196
      %s211 = sphi 0, %s197
      %s215 = sphi 0, %s215
      %s217 = sphi 0, %s215
      %s218 = sphi 0, %s217
      %s232 = sphi 0, %s218
      %s236 = sphi 0, %s236
      %s238 = sphi 0, %s236
      %s239 = sphi 0, %s238
      %s253 = sphi 0, %s239
      %s257 = sphi 0, %s257
      %s259 = sphi 0, %s257
      %s260 = sphi 0, %s259
      %s274 = sphi 0, %s260
      %s278 = sphi 0, %s278
      %s280 = sphi 0, %s278
      %s281 = sphi 0, %s280
      %s295 = sphi 0, %s281
      %s299 = sphi 0, %s299
      %s301 = sphi 0, %s299
      %s302 = sphi 0, %s301
      %s316 = sphi 0, %s302
      %s320 = sphi 0, %s320
      %s322 = sphi 0, %s320
      %s323 = sphi 0, %s322
      %s337 = sphi 0, %s323
      %s341 = sphi 0, %s341
      %s343 = sphi 0, %s341
      %s344 = sphi 0, %s343
      %s358 = sphi 0, %s344
      %s362 = sphi 0, %s362
      %s364 = sphi 0, %s362
      %s365 = sphi 0, %s364
      %s379 = sphi 0, %s365
      %s385 = sphi 0, %s387
      %s388 = sphi 0, %s385
      %s389 = sphi 0, %s388
      %s405 = sphi 0, %s389
    $region4: #{tpu_custom_call.1} parent=1 // loop_header_branch
      %32 = sbr.rel (%p30) target = $region8
    $region5: #{tpu_custom_call.1} parent=1 // loop_body
      %s34 = ssub.s32 %s29, 1
      %s35 = ssub.s32 %s29, 2
      %s36 = sadd.s32 %s29, 1
      %s37 = ssub.s32 %s29, %s36
      %p38 = scmp.eq.s32.totalorder %s37, 0
      %s40 = sadd.s32 %s39, 1
      %s41 = scalar_select %p38, %s39, %s40
      %p44 = pneg %p38
      %p45 = scmp.eq.s32.totalorder %s29, 1
      %p46 = por %p44, %p45
      %p47 = scmp.ne.s32.totalorder %s39, %s42
      %p48 = scmp.eq.s32.totalorder %s29, 0
      %p49 = por %p47, %p48
      %p50 = scmp.ne.s32.totalorder %s39, %s42
      %p51 = scmp.eq.s32.totalorder %s34, 1
      %p52 = por %p50, %p51
      %p53 = scmp.ne.s32.totalorder %s42, %s43
      %p54 = scmp.eq.s32.totalorder %s34, 0
      %p55 = por %p53, %p54
      %p56 = scmp.ne.s32.totalorder %s42, %s43
      %p57 = scmp.eq.s32.totalorder %s35, 1
      %p58 = por %p56, %p57
      %p60 = scmp.ne.s32.totalorder %s43, %s59
      %p61 = scmp.eq.s32.totalorder %s35, 0
      %p62 = por %p60, %p61
      %s63 = ssub.s32 %s29, %s36
      %p64 = scmp.eq.s32.totalorder %s63, 0
      %s66 = sadd.s32 %s65, 1
      %s67 = scalar_select %p64, %s65, %s66
      %p70 = pneg %p64
      %p71 = scmp.eq.s32.totalorder %s29, 1
      %p72 = por %p70, %p71
      %p73 = scmp.ne.s32.totalorder %s65, %s68
      %p74 = scmp.eq.s32.totalorder %s29, 0
      %p75 = por %p73, %p74
      %p76 = scmp.ne.s32.totalorder %s65, %s68
      %p77 = scmp.eq.s32.totalorder %s34, 1
      %p78 = por %p76, %p77
      %p79 = scmp.ne.s32.totalorder %s68, %s69
      %p80 = scmp.eq.s32.totalorder %s34, 0
      %p81 = por %p79, %p80
      %p82 = scmp.ne.s32.totalorder %s68, %s69
      %p83 = scmp.eq.s32.totalorder %s35, 1
      %p84 = por %p82, %p83
      %p86 = scmp.ne.s32.totalorder %s69, %s85
      %p87 = scmp.eq.s32.totalorder %s35, 0
      %p88 = por %p86, %p87
      %s90 = sadd.s32 %s89, 1
      %p93 = scmp.eq.s32.totalorder %s29, 1
      %p94 = scmp.ne.s32.totalorder %s89, %s91
      %p95 = scmp.eq.s32.totalorder %s29, 0
      %p96 = por %p94, %p95
      %p97 = scmp.ne.s32.totalorder %s89, %s91
      %p98 = scmp.eq.s32.totalorder %s34, 1
      %p99 = por %p97, %p98
      %p100 = scmp.ne.s32.totalorder %s91, %s92
      %p101 = scmp.eq.s32.totalorder %s34, 0
      %p102 = por %p100, %p101
      %p103 = scmp.ne.s32.totalorder %s91, %s92
      %p104 = scmp.eq.s32.totalorder %s35, 1
      %p105 = por %p103, %p104
      %p107 = scmp.ne.s32.totalorder %s92, %s106
      %p108 = scmp.eq.s32.totalorder %s35, 0
      %p109 = por %p107, %p108
      %s111 = sadd.s32 %s110, 1
      %p114 = scmp.eq.s32.totalorder %s29, 1
      %p115 = scmp.ne.s32.totalorder %s110, %s112
      %p116 = scmp.eq.s32.totalorder %s29, 0
      %p117 = por %p115, %p116
      %p118 = scmp.ne.s32.totalorder %s110, %s112
      %p119 = scmp.eq.s32.totalorder %s34, 1
      %p120 = por %p118, %p119
      %p121 = scmp.ne.s32.totalorder %s112, %s113
      %p122 = scmp.eq.s32.totalorder %s34, 0
      %p123 = por %p121, %p122
      %p124 = scmp.ne.s32.totalorder %s112, %s113
      %p125 = scmp.eq.s32.totalorder %s35, 1
      %p126 = por %p124, %p125
      %p128 = scmp.ne.s32.totalorder %s113, %s127
      %p129 = scmp.eq.s32.totalorder %s35, 0
      %p130 = por %p128, %p129
      %s132 = sadd.s32 %s131, 1
      %p135 = scmp.eq.s32.totalorder %s29, 1
      %p136 = scmp.ne.s32.totalorder %s131, %s133
      %p137 = scmp.eq.s32.totalorder %s29, 0
      %p138 = por %p136, %p137
      %p139 = scmp.ne.s32.totalorder %s131, %s133
      %p140 = scmp.eq.s32.totalorder %s34, 1
      %p141 = por %p139, %p140
      %p142 = scmp.ne.s32.totalorder %s133, %s134
      %p143 = scmp.eq.s32.totalorder %s34, 0
      %p144 = por %p142, %p143
      %p145 = scmp.ne.s32.totalorder %s133, %s134
      %p146 = scmp.eq.s32.totalorder %s35, 1
      %p147 = por %p145, %p146
      %p149 = scmp.ne.s32.totalorder %s134, %s148
      %p150 = scmp.eq.s32.totalorder %s35, 0
      %p151 = por %p149, %p150
      %s153 = sadd.s32 %s152, 1
      %p156 = scmp.eq.s32.totalorder %s29, 1
      %p157 = scmp.ne.s32.totalorder %s152, %s154
      %p158 = scmp.eq.s32.totalorder %s29, 0
      %p159 = por %p157, %p158
      %p160 = scmp.ne.s32.totalorder %s152, %s154
      %p161 = scmp.eq.s32.totalorder %s34, 1
      %p162 = por %p160, %p161
      %p163 = scmp.ne.s32.totalorder %s154, %s155
      %p164 = scmp.eq.s32.totalorder %s34, 0
      %p165 = por %p163, %p164
      %p166 = scmp.ne.s32.totalorder %s154, %s155
      %p167 = scmp.eq.s32.totalorder %s35, 1
      %p168 = por %p166, %p167
      %p170 = scmp.ne.s32.totalorder %s155, %s169
      %p171 = scmp.eq.s32.totalorder %s35, 0
      %p172 = por %p170, %p171
      %s174 = sadd.s32 %s173, 1
      %p177 = scmp.eq.s32.totalorder %s29, 1
      %p178 = scmp.ne.s32.totalorder %s173, %s175
      %p179 = scmp.eq.s32.totalorder %s29, 0
      %p180 = por %p178, %p179
      %p181 = scmp.ne.s32.totalorder %s173, %s175
      %p182 = scmp.eq.s32.totalorder %s34, 1
      %p183 = por %p181, %p182
      %p184 = scmp.ne.s32.totalorder %s175, %s176
      %p185 = scmp.eq.s32.totalorder %s34, 0
      %p186 = por %p184, %p185
      %p187 = scmp.ne.s32.totalorder %s175, %s176
      %p188 = scmp.eq.s32.totalorder %s35, 1
      %p189 = por %p187, %p188
      %p191 = scmp.ne.s32.totalorder %s176, %s190
      %p192 = scmp.eq.s32.totalorder %s35, 0
      %p193 = por %p191, %p192
      %s195 = sadd.s32 %s194, 1
      %p198 = scmp.eq.s32.totalorder %s29, 1
      %p199 = scmp.ne.s32.totalorder %s194, %s196
      %p200 = scmp.eq.s32.totalorder %s29, 0
      %p201 = por %p199, %p200
      %p202 = scmp.ne.s32.totalorder %s194, %s196
      %p203 = scmp.eq.s32.totalorder %s34, 1
      %p204 = por %p202, %p203
      %p205 = scmp.ne.s32.totalorder %s196, %s197
      %p206 = scmp.eq.s32.totalorder %s34, 0
      %p207 = por %p205, %p206
      %p208 = scmp.ne.s32.totalorder %s196, %s197
      %p209 = scmp.eq.s32.totalorder %s35, 1
      %p210 = por %p208, %p209
      %p212 = scmp.ne.s32.totalorder %s197, %s211
      %p213 = scmp.eq.s32.totalorder %s35, 0
      %p214 = por %p212, %p213
      %s216 = sadd.s32 %s215, 1
      %p219 = scmp.eq.s32.totalorder %s29, 1
      %p220 = scmp.ne.s32.totalorder %s215, %s217
      %p221 = scmp.eq.s32.totalorder %s29, 0
      %p222 = por %p220, %p221
      %p223 = scmp.ne.s32.totalorder %s215, %s217
      %p224 = scmp.eq.s32.totalorder %s34, 1
      %p225 = por %p223, %p224
      %p226 = scmp.ne.s32.totalorder %s217, %s218
      %p227 = scmp.eq.s32.totalorder %s34, 0
      %p228 = por %p226, %p227
      %p229 = scmp.ne.s32.totalorder %s217, %s218
      %p230 = scmp.eq.s32.totalorder %s35, 1
      %p231 = por %p229, %p230
      %p233 = scmp.ne.s32.totalorder %s218, %s232
      %p234 = scmp.eq.s32.totalorder %s35, 0
      %p235 = por %p233, %p234
      %s237 = sadd.s32 %s236, 1
      %p240 = scmp.eq.s32.totalorder %s29, 1
      %p241 = scmp.ne.s32.totalorder %s236, %s238
      %p242 = scmp.eq.s32.totalorder %s29, 0
      %p243 = por %p241, %p242
      %p244 = scmp.ne.s32.totalorder %s236, %s238
      %p245 = scmp.eq.s32.totalorder %s34, 1
      %p246 = por %p244, %p245
      %p247 = scmp.ne.s32.totalorder %s238, %s239
      %p248 = scmp.eq.s32.totalorder %s34, 0
      %p249 = por %p247, %p248
      %p250 = scmp.ne.s32.totalorder %s238, %s239
      %p251 = scmp.eq.s32.totalorder %s35, 1
      %p252 = por %p250, %p251
      %p254 = scmp.ne.s32.totalorder %s239, %s253
      %p255 = scmp.eq.s32.totalorder %s35, 0
      %p256 = por %p254, %p255
      %s258 = sadd.s32 %s257, 1
      %p261 = scmp.eq.s32.totalorder %s29, 1
      %p262 = scmp.ne.s32.totalorder %s257, %s259
      %p263 = scmp.eq.s32.totalorder %s29, 0
      %p264 = por %p262, %p263
      %p265 = scmp.ne.s32.totalorder %s257, %s259
      %p266 = scmp.eq.s32.totalorder %s34, 1
      %p267 = por %p265, %p266
      %p268 = scmp.ne.s32.totalorder %s259, %s260
      %p269 = scmp.eq.s32.totalorder %s34, 0
      %p270 = por %p268, %p269
      %p271 = scmp.ne.s32.totalorder %s259, %s260
      %p272 = scmp.eq.s32.totalorder %s35, 1
      %p273 = por %p271, %p272
      %p275 = scmp.ne.s32.totalorder %s260, %s274
      %p276 = scmp.eq.s32.totalorder %s35, 0
      %p277 = por %p275, %p276
      %s279 = sadd.s32 %s278, 1
      %p282 = scmp.eq.s32.totalorder %s29, 1
      %p283 = scmp.ne.s32.totalorder %s278, %s280
      %p284 = scmp.eq.s32.totalorder %s29, 0
      %p285 = por %p283, %p284
      %p286 = scmp.ne.s32.totalorder %s278, %s280
      %p287 = scmp.eq.s32.totalorder %s34, 1
      %p288 = por %p286, %p287
      %p289 = scmp.ne.s32.totalorder %s280, %s281
      %p290 = scmp.eq.s32.totalorder %s34, 0
      %p291 = por %p289, %p290
      %p292 = scmp.ne.s32.totalorder %s280, %s281
      %p293 = scmp.eq.s32.totalorder %s35, 1
      %p294 = por %p292, %p293
      %p296 = scmp.ne.s32.totalorder %s281, %s295
      %p297 = scmp.eq.s32.totalorder %s35, 0
      %p298 = por %p296, %p297
      %s300 = sadd.s32 %s299, 1
      %p303 = scmp.eq.s32.totalorder %s29, 1
      %p304 = scmp.ne.s32.totalorder %s299, %s301
      %p305 = scmp.eq.s32.totalorder %s29, 0
      %p306 = por %p304, %p305
      %p307 = scmp.ne.s32.totalorder %s299, %s301
      %p308 = scmp.eq.s32.totalorder %s34, 1
      %p309 = por %p307, %p308
      %p310 = scmp.ne.s32.totalorder %s301, %s302
      %p311 = scmp.eq.s32.totalorder %s34, 0
      %p312 = por %p310, %p311
      %p313 = scmp.ne.s32.totalorder %s301, %s302
      %p314 = scmp.eq.s32.totalorder %s35, 1
      %p315 = por %p313, %p314
      %p317 = scmp.ne.s32.totalorder %s302, %s316
      %p318 = scmp.eq.s32.totalorder %s35, 0
      %p319 = por %p317, %p318
      %s321 = sadd.s32 %s320, 1
      %p324 = scmp.eq.s32.totalorder %s29, 1
      %p325 = scmp.ne.s32.totalorder %s320, %s322
      %p326 = scmp.eq.s32.totalorder %s29, 0
      %p327 = por %p325, %p326
      %p328 = scmp.ne.s32.totalorder %s320, %s322
      %p329 = scmp.eq.s32.totalorder %s34, 1
      %p330 = por %p328, %p329
      %p331 = scmp.ne.s32.totalorder %s322, %s323
      %p332 = scmp.eq.s32.totalorder %s34, 0
      %p333 = por %p331, %p332
      %p334 = scmp.ne.s32.totalorder %s322, %s323
      %p335 = scmp.eq.s32.totalorder %s35, 1
      %p336 = por %p334, %p335
      %p338 = scmp.ne.s32.totalorder %s323, %s337
      %p339 = scmp.eq.s32.totalorder %s35, 0
      %p340 = por %p338, %p339
      %s342 = sadd.s32 %s341, 1
      %p345 = scmp.eq.s32.totalorder %s29, 1
      %p346 = scmp.ne.s32.totalorder %s341, %s343
      %p347 = scmp.eq.s32.totalorder %s29, 0
      %p348 = por %p346, %p347
      %p349 = scmp.ne.s32.totalorder %s341, %s343
      %p350 = scmp.eq.s32.totalorder %s34, 1
      %p351 = por %p349, %p350
      %p352 = scmp.ne.s32.totalorder %s343, %s344
      %p353 = scmp.eq.s32.totalorder %s34, 0
      %p354 = por %p352, %p353
      %p355 = scmp.ne.s32.totalorder %s343, %s344
      %p356 = scmp.eq.s32.totalorder %s35, 1
      %p357 = por %p355, %p356
      %p359 = scmp.ne.s32.totalorder %s344, %s358
      %p360 = scmp.eq.s32.totalorder %s35, 0
      %p361 = por %p359, %p360
      %s363 = sadd.s32 %s362, 1
      %p366 = scmp.eq.s32.totalorder %s29, 1
      %p367 = scmp.ne.s32.totalorder %s362, %s364
      %p368 = scmp.eq.s32.totalorder %s29, 0
      %p369 = por %p367, %p368
      %p370 = scmp.ne.s32.totalorder %s362, %s364
      %p371 = scmp.eq.s32.totalorder %s34, 1
      %p372 = por %p370, %p371
      %p373 = scmp.ne.s32.totalorder %s364, %s365
      %p374 = scmp.eq.s32.totalorder %s34, 0
      %p375 = por %p373, %p374
      %p376 = scmp.ne.s32.totalorder %s364, %s365
      %p377 = scmp.eq.s32.totalorder %s35, 1
      %p378 = por %p376, %p377
      %p380 = scmp.ne.s32.totalorder %s365, %s379
      %p381 = scmp.eq.s32.totalorder %s35, 0
      %p382 = por %p380, %p381
      %s383 = ssub.s32 %s29, %s36
      %p384 = scmp.eq.s32.totalorder %s383, 0
      %s386 = sadd.s32 %s385, 1
      %s387 = scalar_select %p384, %s385, %s386
      %p390 = pneg %p384
      %p391 = scmp.eq.s32.totalorder %s29, 1
      %p392 = por %p390, %p391
      %p393 = scmp.ne.s32.totalorder %s385, %s388
      %p394 = scmp.eq.s32.totalorder %s29, 0
      %p395 = por %p393, %p394
      %p396 = scmp.ne.s32.totalorder %s385, %s388
      %p397 = scmp.eq.s32.totalorder %s34, 1
      %p398 = por %p396, %p397
      %p399 = scmp.ne.s32.totalorder %s388, %s389
      %p400 = scmp.eq.s32.totalorder %s34, 0
      %p401 = por %p399, %p400
      %p402 = scmp.ne.s32.totalorder %s388, %s389
      %p403 = scmp.eq.s32.totalorder %s35, 1
      %p404 = por %p402, %p403
      %p406 = scmp.ne.s32.totalorder %s389, %s405
      %p407 = scmp.eq.s32.totalorder %s35, 0
      %p408 = por %p406, %p407
      %p409 = scmp.le.s32.totalorder 1, %s29
      %p410 = scmp.lt.s32.totalorder %s29, 3
      %p411 = pnand %p409, %p410
      %p412 = pneg %p411
      // Predicated region
      $region9: #{tpu_custom_call.1} parent=5 // pred_check
        _
      $region10: #{tpu_custom_call.1} parent=5 // pred_check_branch
        %414 = sbr.rel (%p411) target = $region12
      $region11: #{tpu_custom_call.1} parent=5 // pred_region
        %s415 = ssub.s32 %s29, 1
        // Predicated region
        $region13: #{tpu_custom_call.1} parent=11 // pred_check
          %p416 = pneg %p102
        $region14: #{tpu_custom_call.1} parent=11 // pred_check_branch
          %418 = sbr.rel (%p416) target = $region16
        $region15: #{tpu_custom_call.1} parent=11 // pred_region
          %s420 = ssub.s32 16, 16
          %421 = vsyncadd [#allocation3], %s420
          %s423 = sshll.u32 [#allocation2], 4
          %s424 = int_to_ptr.vmem [resolvable:$true] %s423
          %426 = dma.hbm_to_vmem [thread:$0]  %s2, 16, %s424, [#allocation3]
        $region16: #{tpu_custom_call.1} parent=11 // pred_fallthru
          _
        // Predicated region
        $region17: #{tpu_custom_call.1} parent=11 // pred_check
          %p427 = pneg %p123
        $region18: #{tpu_custom_call.1} parent=11 // pred_check_branch
          %429 = sbr.rel (%p427) target = $region20
        $region19: #{tpu_custom_call.1} parent=11 // pred_region
          %s431 = ssub.s32 16, 16
          %432 = vsyncadd [#allocation6], %s431
          %s434 = sshll.u32 [#allocation5], 4
          %s435 = int_to_ptr.vmem [resolvable:$true] %s434
          %437 = dma.hbm_to_vmem [thread:$0]  %s3, 16, %s435, [#allocation6]
        $region20: #{tpu_custom_call.1} parent=11 // pred_fallthru
          _
        // Predicated region
        $region21: #{tpu_custom_call.1} parent=11 // pred_check
          %p438 = pneg %p144
        $region22: #{tpu_custom_call.1} parent=11 // pred_check_branch
          %440 = sbr.rel (%p438) target = $region24
        $region23: #{tpu_custom_call.1} parent=11 // pred_region
          _
        $region24: #{tpu_custom_call.1} parent=11 // pred_fallthru
          _
        // Predicated region
        $region25: #{tpu_custom_call.1} parent=11 // pred_check
          %p441 = pneg %p165
        $region26: #{tpu_custom_call.1} parent=11 // pred_check_branch
          %443 = sbr.rel (%p441) target = $region28
        $region27: #{tpu_custom_call.1} parent=11 // pred_region
          %s445 = ssub.s32 16, 16
          %446 = vsyncadd [#allocation6], %s445
          %s448 = sshll.u32 [#allocation7], 4
          %s449 = int_to_ptr.vmem [resolvable:$true] %s448
          %451 = dma.hbm_to_vmem [thread:$0]  %s5, 16, %s449, [#allocation6]
        $region28: #{tpu_custom_call.1} parent=11 // pred_fallthru
          _
        // Predicated region
        $region29: #{tpu_custom_call.1} parent=11 // pred_check
          %p452 = pneg %p186
        $region30: #{tpu_custom_call.1} parent=11 // pred_check_branch
          %454 = sbr.rel (%p452) target = $region32
        $region31: #{tpu_custom_call.1} parent=11 // pred_region
          _
        $region32: #{tpu_custom_call.1} parent=11 // pred_fallthru
          _
        // Predicated region
        $region33: #{tpu_custom_call.1} parent=11 // pred_check
          %p455 = pneg %p207
        $region34: #{tpu_custom_call.1} parent=11 // pred_check_branch
          %457 = sbr.rel (%p455) target = $region36
        $region35: #{tpu_custom_call.1} parent=11 // pred_region
          %s459 = ssub.s32 16, 16
          %460 = vsyncadd [#allocation9], %s459
          %s462 = sshll.u32 [#allocation8], 4
          %s463 = int_to_ptr.vmem [resolvable:$true] %s462
          %465 = dma.hbm_to_vmem [thread:$0]  %s7, 16, %s463, [#allocation9]
        $region36: #{tpu_custom_call.1} parent=11 // pred_fallthru
          _
        // Predicated region
        $region37: #{tpu_custom_call.1} parent=11 // pred_check
          %p466 = pneg %p228
        $region38: #{tpu_custom_call.1} parent=11 // pred_check_branch
          %468 = sbr.rel (%p466) target = $region40
        $region39: #{tpu_custom_call.1} parent=11 // pred_region
          %s470 = ssub.s32 16, 16
          %471 = vsyncadd [#allocation9], %s470
          %s473 = sshll.u32 [#allocation10], 4
          %s474 = int_to_ptr.vmem [resolvable:$true] %s473
          %476 = dma.hbm_to_vmem [thread:$0]  %s8, 16, %s474, [#allocation9]
        $region40: #{tpu_custom_call.1} parent=11 // pred_fallthru
          _
        // Predicated region
        $region41: #{tpu_custom_call.1} parent=11 // pred_check
          %p477 = pneg %p249
        $region42: #{tpu_custom_call.1} parent=11 // pred_check_branch
          %479 = sbr.rel (%p477) target = $region44
        $region43: #{tpu_custom_call.1} parent=11 // pred_region
          %s481 = ssub.s32 16, 16
          %482 = vsyncadd [#allocation12], %s481
          %s484 = sshll.u32 [#allocation11], 4
          %s485 = int_to_ptr.vmem [resolvable:$true] %s484
          %487 = dma.hbm_to_vmem [thread:$0]  %s9, 16, %s485, [#allocation12]
        $region44: #{tpu_custom_call.1} parent=11 // pred_fallthru
          _
        // Predicated region
        $region45: #{tpu_custom_call.1} parent=11 // pred_check
          %p488 = pneg %p270
        $region46: #{tpu_custom_call.1} parent=11 // pred_check_branch
          %490 = sbr.rel (%p488) target = $region48
        $region47: #{tpu_custom_call.1} parent=11 // pred_region
          _
        $region48: #{tpu_custom_call.1} parent=11 // pred_fallthru
          _
        // Predicated region
        $region49: #{tpu_custom_call.1} parent=11 // pred_check
          %p491 = pneg %p291
        $region50: #{tpu_custom_call.1} parent=11 // pred_check_branch
          %493 = sbr.rel (%p491) target = $region52
        $region51: #{tpu_custom_call.1} parent=11 // pred_region
          _
        $region52: #{tpu_custom_call.1} parent=11 // pred_fallthru
          _
        // Predicated region
        $region53: #{tpu_custom_call.1} parent=11 // pred_check
          %p494 = pneg %p312
        $region54: #{tpu_custom_call.1} parent=11 // pred_check_branch
          %496 = sbr.rel (%p494) target = $region56
        $region55: #{tpu_custom_call.1} parent=11 // pred_region
          _
        $region56: #{tpu_custom_call.1} parent=11 // pred_fallthru
          _
        // Predicated region
        $region57: #{tpu_custom_call.1} parent=11 // pred_check
          %p497 = pneg %p333
        $region58: #{tpu_custom_call.1} parent=11 // pred_check_branch
          %499 = sbr.rel (%p497) target = $region60
        $region59: #{tpu_custom_call.1} parent=11 // pred_region
          _
        $region60: #{tpu_custom_call.1} parent=11 // pred_fallthru
          _
        // Predicated region
        $region61: #{tpu_custom_call.1} parent=11 // pred_check
          %p500 = pneg %p354
        $region62: #{tpu_custom_call.1} parent=11 // pred_check_branch
          %502 = sbr.rel (%p500) target = $region64
        $region63: #{tpu_custom_call.1} parent=11 // pred_region
          _
        $region64: #{tpu_custom_call.1} parent=11 // pred_fallthru
          _
        // Predicated region
        $region65: #{tpu_custom_call.1} parent=11 // pred_check
          %p503 = pneg %p375
        $region66: #{tpu_custom_call.1} parent=11 // pred_check_branch
          %505 = sbr.rel (%p503) target = $region68
        $region67: #{tpu_custom_call.1} parent=11 // pred_region
          _
        $region68: #{tpu_custom_call.1} parent=11 // pred_fallthru
          _
      $region12: #{tpu_custom_call.1} parent=5 // pred_fallthru
        _
      %p506 = scmp.lt.s32.totalorder %s29, 2
      // Predicated region
      $region69: #{tpu_custom_call.1} parent=5 // pred_check
        %p507 = pneg %p506
      $region70: #{tpu_custom_call.1} parent=5 // pred_check_branch
        %509 = sbr.rel (%p507) target = $region72
      $region71: #{tpu_custom_call.1} parent=5 // pred_region
        // Predicated region
        $region73: #{tpu_custom_call.1} parent=71 // pred_check
          %p510 = pneg %p49
        $region74: #{tpu_custom_call.1} parent=71 // pred_check_branch
          %512 = sbr.rel (%p510) target = $region76
        $region75: #{tpu_custom_call.1} parent=71 // pred_region
          %p513 = scmp.lt.s32.totalorder %s29, 1
          %s514 = scalar_select %p513, %s29, 1
          %s515 = smul.addr %s514, 8
          %s516 = scalar_lea.vmem %s0, %s515
        $region76: #{tpu_custom_call.1} parent=71 // pred_fallthru
          _
        // Predicated region
        $region77: #{tpu_custom_call.1} parent=71 // pred_check
          %p517 = pneg %p75
        $region78: #{tpu_custom_call.1} parent=71 // pred_check_branch
          %519 = sbr.rel (%p517) target = $region80
        $region79: #{tpu_custom_call.1} parent=71 // pred_region
          %p520 = scmp.lt.s32.totalorder %s29, 1
          %s521 = scalar_select %p520, %s29, 1
          %s522 = scalar_lea.vmem %s1, %s521
        $region80: #{tpu_custom_call.1} parent=71 // pred_fallthru
          _
      $region72: #{tpu_custom_call.1} parent=5 // pred_fallthru
        _
      %p523 = scmp.le.s32.totalorder 1, %s29
      %p524 = scmp.lt.s32.totalorder %s29, 3
      %p525 = pnand %p523, %p524
      %p526 = pneg %p525
      // Predicated region
      $region81: #{tpu_custom_call.1} parent=5 // pred_check
        _
      $region82: #{tpu_custom_call.1} parent=5 // pred_check_branch
        %528 = sbr.rel (%p525) target = $region84
      $region83: #{tpu_custom_call.1} parent=5 // pred_region
        %s529 = ssub.s32 %s29, 1
        // Predicated region
        $region85: #{tpu_custom_call.1} parent=83 // pred_check
          %p530 = pneg %p102
        $region86: #{tpu_custom_call.1} parent=83 // pred_check_branch
          %532 = sbr.rel (%p530) target = $region88
        $region87: #{tpu_custom_call.1} parent=83 // pred_region
          %533 = dma.done [#allocation3], 16
        $region88: #{tpu_custom_call.1} parent=83 // pred_fallthru
          _
        // Predicated region
        $region89: #{tpu_custom_call.1} parent=83 // pred_check
          %p534 = pneg %p123
        $region90: #{tpu_custom_call.1} parent=83 // pred_check_branch
          %536 = sbr.rel (%p534) target = $region92
        $region91: #{tpu_custom_call.1} parent=83 // pred_region
          %537 = dma.done [#allocation6], 16
        $region92: #{tpu_custom_call.1} parent=83 // pred_fallthru
          _
        // Predicated region
        $region93: #{tpu_custom_call.1} parent=83 // pred_check
          %p538 = pneg %p165
        $region94: #{tpu_custom_call.1} parent=83 // pred_check_branch
          %540 = sbr.rel (%p538) target = $region96
        $region95: #{tpu_custom_call.1} parent=83 // pred_region
          %541 = dma.done [#allocation6], 16
        $region96: #{tpu_custom_call.1} parent=83 // pred_fallthru
          _
        // Predicated region
        $region97: #{tpu_custom_call.1} parent=83 // pred_check
          %p542 = pneg %p207
        $region98: #{tpu_custom_call.1} parent=83 // pred_check_branch
          %544 = sbr.rel (%p542) target = $region100
        $region99: #{tpu_custom_call.1} parent=83 // pred_region
          %545 = dma.done [#allocation9], 16
        $region100: #{tpu_custom_call.1} parent=83 // pred_fallthru
          _
        // Predicated region
        $region101: #{tpu_custom_call.1} parent=83 // pred_check
          %p546 = pneg %p228
        $region102: #{tpu_custom_call.1} parent=83 // pred_check_branch
          %548 = sbr.rel (%p546) target = $region104
        $region103: #{tpu_custom_call.1} parent=83 // pred_region
          %549 = dma.done [#allocation9], 16
        $region104: #{tpu_custom_call.1} parent=83 // pred_fallthru
          _
        // Predicated region
        $region105: #{tpu_custom_call.1} parent=83 // pred_check
          %p550 = pneg %p249
        $region106: #{tpu_custom_call.1} parent=83 // pred_check_branch
          %552 = sbr.rel (%p550) target = $region108
        $region107: #{tpu_custom_call.1} parent=83 // pred_region
          %553 = dma.done [#allocation12], 16
        $region108: #{tpu_custom_call.1} parent=83 // pred_fallthru
          _
        %p554 = scmp.lt.s32.totalorder %s34, 1
        %s555 = scalar_select %p554, %s34, 1
        %s556 = smul.addr %s555, 8
        %s557 = scalar_lea.vmem %s0, %s556
        %p558 = pneg %p55
        %p559 = pneg %p52
        %p560 = scmp.lt.s32.totalorder %s34, 1
        %s561 = scalar_select %p560, %s34, 1
        %s562 = scalar_lea.vmem %s1, %s561
        %p563 = pneg %p81
        %p564 = pneg %p78
        %p565 = pneg %p102
        %p566 = pneg %p99
        %p567 = pneg %p123
        %p568 = pneg %p120
        %p569 = pneg %p144
        %p570 = pneg %p141
        %p571 = pneg %p165
        %p572 = pneg %p162
        %p573 = pneg %p186
        %p574 = pneg %p183
        %p575 = pneg %p207
        %p576 = pneg %p204
        %p577 = pneg %p228
        %p578 = pneg %p225
        %p579 = pneg %p249
        %p580 = pneg %p246
        %p581 = pneg %p270
        %p582 = pneg %p267
        %p583 = pneg %p291
        %p584 = pneg %p288
        %p585 = pneg %p312
        %p586 = pneg %p309
        %p587 = pneg %p333
        %p588 = pneg %p330
        %p589 = pneg %p354
        %p590 = pneg %p351
        %p591 = pneg %p375
        %p592 = pneg %p372
        %p593 = pneg %p401
        %p594 = pneg %p398
        %s595 = sand.u32 %s388, 1
        %s596 = scalar_lea.sflag [#allocation4], %s595
        %s597 = sand.u32 %s388, 1
        %s598 = smul.addr %s597, 8
        %s599 = scalar_lea.vmem [#allocation13], %s598
        %p600 = scmp.lt.s32.totalorder %s34, 1
        %s601 = scalar_select %p600, %s34, 1
        %s602 = smul.addr %s601, 8
        %s603 = scalar_lea.vmem %s0, %s602
        %p604 = scmp.lt.s32.totalorder %s34, 1
        %s605 = scalar_select %p604, %s34, 1
        %s606 = scalar_lea.vmem %s1, %s605
        %v608 = vld [vmem:[%s603] sm:$0xff]
        %v609 = vld [vmem:[#allocation2] sm:$0x1]
        %v610 = vld [vmem:[#allocation5] sm:$0x1]
        %vm611 = vcmask 261120
        %v612 = vsel %vm611, %v608, 0.0
        %613 = vadd.xlane.f32.xlu0 %v612
        %v614 = vpop.xlane.xlu0 %613
        %v615 = vrcp.pop 32.0
        %v616 = vmul.f32 %v614, %v615
        %v617 = vsub.f32 %v608, %v616
        %v618 = vmul.f32 %v617, %v617
        %v619 = vsel %vm611, %v618, 0.0
        %620 = vadd.xlane.f32.xlu0 %v619
        %v621 = vpop.xlane.xlu0 %620
        %v622 = vmul.f32 %v621, %v615
        %v623 = vadd.f32 %v622, 1e-12
        %v624 = vrsqrt.pop %v623
        %v625 = vmul.f32 %v617, %v624
        %v627 = vlaneseq
        %v628 = vshrl.u32 %v627, 7
        %v629 = vsub.s32 0, %v628
        %v630 = vrot.slane %v609, %v629
        %v632 = vmul.f32 %v625, %v630
        %v634 = vlaneseq
        %v635 = vshrl.u32 %v634, 7
        %v636 = vsub.s32 0, %v635
        %v637 = vrot.slane %v610, %v636
        %v639 = vadd.f32 %v632, %v637
        %v640 = vpack.c.bf16 %v639, %v639
        %v641 = vld [vmem:[%s4] sm:$0xf]
        %v642 = vld [vmem:[%s4 + $0x4] sm:$0xf]
        %v643 = vld [vmem:[%s4 + $0x8] sm:$0xf]
        %v644 = vld [vmem:[%s4 + $0xc] sm:$0xf]
        %v645 = vld [vmem:[#allocation7] sm:$0x1]
        %v647 = vlaneseq
        %v648 = vshrl.u32 %v647, 7
        %v649 = vsub.s32 0, %v648
        %v650 = vrot.slane %v645, %v649
        %v656 = vunpack.c.l.b16 %v641
        %v657 = vunpack.c.l.b16 %v642
        %v658 = vunpack.c.l.b16 %v643
        %v659 = vunpack.c.l.b16 %v644
        %v660 = vpack.c.b16 %v657, %v656
        %v661 = vpack.c.b16 %v659, %v658
        %v665 = vsel %vm611, %v640, 0
        %667 = vmatprep.subr.bf16.mxu0 0
        %668 = vmatpush1.bf16.msra.mxu0 %v660
        %669 = vmatprep.subr.bf16.mxu0 0
        %670 = vmatpush1.bf16.msra.mxu0 %v661
        %671 = vmatprep.subr.bf16.mxu0 0
        %672 = vmatpush1.bf16.msra.mxu0 0
        %673 = vmatprep.subr.bf16.mxu0 0
        %674 = vmatpush1.bf16.msra.mxu0 0
        %675 = vmatprep.subr.bf16.mxu0 0
        %676 = vmatpush1.bf16.msra.mxu0 0
        %677 = vmatprep.subr.bf16.mxu0 0
        %678 = vmatpush1.bf16.msra.mxu0 0
        %679 = vmatprep.subr.bf16.mxu0 0
        %680 = vmatpush1.bf16.msra.mxu0 0
        %681 = vmatprep.subr.bf16.mxu0 0
        %682 = vmatpush1.bf16.msra.mxu0 0
        %683 = vmatprep.subr.bf16.mxu0 0
        %684 = vmatpush1.bf16.msra.mxu0 0
        %685 = vmatprep.subr.bf16.mxu0 0
        %686 = vmatpush1.bf16.msra.mxu0 0
        %687 = vmatprep.subr.bf16.mxu0 0
        %688 = vmatpush1.bf16.msra.mxu0 0
        %689 = vmatprep.subr.bf16.mxu0 0
        %690 = vmatpush1.bf16.msra.mxu0 0
        %691 = vmatprep.subr.bf16.mxu0 0
        %692 = vmatpush1.bf16.msra.mxu0 0
        %693 = vmatprep.subr.bf16.mxu0 0
        %694 = vmatpush1.bf16.msra.mxu0 0
        %695 = vmatprep.subr.bf16.mxu0 0
        %696 = vmatpush1.bf16.msra.mxu0 0
        %697 = vmatprep.subr.bf16.mxu0 0
        %698 = vmatpush1.bf16.msra.mxu0 0
        %699 = vmatprep.mubr.bf16.mxu0 0
        %700 = vmatmul.mubr.bf16.gmra.mrb[0].mxu0 %v665
        %v701 = vpop.f32.mrb[0].mxu0
        %v702 = vadd.f32 %v650, %v701
        %v703 = vpop.f32.mrb[0].mxu0
        %v704 = vpop.f32.mrb[0].mxu0
        %v705 = vpop.f32.mrb[0].mxu0
        %706 = vdwg.mxu0
        %v707 = vld [vmem:[%s606] sm:$0x1]
        %v709 = vlaneseq
        %v710 = vshrl.u32 %v709, 7
        %v711 = vsub.s32 0, %v710
        %v712 = vrot.slane %v707, %v711
        %v714 = vpack.c.bf16 %v702, %v702
        %716 = vrot.lane.b32.xlu0 %v714, 96
        %v717 = vpop.permute.xlu0 %716
        %vm718 = vcmask 64512
        %v720 = vsel %vm718, %v714, 0
        %v723 = vsel %vm718, %v717, 0
        %725 = vmatprep.subr.bf16.mxu0 0
        %726 = vmatpush1.bf16.xpose.msra.mxu0 %v723
        %727 = vmatprep.subr.bf16.mxu0 0
        %728 = vmatpush1.bf16.xpose.msra.mxu0 0
        %729 = vmatprep.subr.bf16.mxu0 0
        %730 = vmatpush1.bf16.xpose.msra.mxu0 0
        %731 = vmatprep.subr.bf16.mxu0 0
        %732 = vmatpush1.bf16.xpose.msra.mxu0 0
        %733 = vmatprep.subr.bf16.mxu0 0
        %734 = vmatpush1.bf16.xpose.msra.mxu0 0
        %735 = vmatprep.subr.bf16.mxu0 0
        %736 = vmatpush1.bf16.xpose.msra.mxu0 0
        %737 = vmatprep.subr.bf16.mxu0 0
        %738 = vmatpush1.bf16.xpose.msra.mxu0 0
        %739 = vmatprep.subr.bf16.mxu0 0
        %740 = vmatpush1.bf16.xpose.msra.mxu0 0
        %741 = vmatprep.subr.bf16.mxu0 0
        %742 = vmatpush1.bf16.xpose.msra.mxu0 0
        %743 = vmatprep.subr.bf16.mxu0 0
        %744 = vmatpush1.bf16.xpose.msra.mxu0 0
        %745 = vmatprep.subr.bf16.mxu0 0
        %746 = vmatpush1.bf16.xpose.msra.mxu0 0
        %747 = vmatprep.subr.bf16.mxu0 0
        %748 = vmatpush1.bf16.xpose.msra.mxu0 0
        %749 = vmatprep.subr.bf16.mxu0 0
        %750 = vmatpush1.bf16.xpose.msra.mxu0 0
        %751 = vmatprep.subr.bf16.mxu0 0
        %752 = vmatpush1.bf16.xpose.msra.mxu0 0
        %753 = vmatprep.subr.bf16.mxu0 0
        %754 = vmatpush1.bf16.xpose.msra.mxu0 0
        %755 = vmatprep.subr.bf16.mxu0 0
        %756 = vmatpush1.bf16.xpose.msra.mxu0 0
        %757 = vmatprep.mubr.bf16.mxu0 0
        %758 = vmatmul.mubr.bf16.gmra.mrb[0].mxu0 %v720
        %v759 = vpop.f32.mrb[0].mxu0
        %v760 = vadd.f32 0.0, %v759
        %v761 = vpop.f32.mrb[0].mxu0
        %v762 = vpop.f32.mrb[0].mxu0
        %v763 = vpop.f32.mrb[0].mxu0
        %764 = vdwg.mxu0
        %v765 = vmul.f32 %v760, 0.35355338
        %v766 = vadd.f32 %v765, %v712
        %v767 = vsel %vm718, %v766, -inf
        %768 = vmax.xlane.f32.xlu0 %v767
        %v769 = vpop.xlane.xlu0 %768
        %v770 = vsub.f32 %v766, %v769
        %v771 = vmul.f32 %v770, 1.442695
        %v772 = vpow.pop %v771
        %v773 = vsel %vm718, %v772, 0.0
        %774 = vadd.xlane.f32.xlu0 %v773
        %v775 = vpop.xlane.xlu0 %774
        %v776 = vrcp.pop %v775
        %v777 = vmul.f32 %v772, %v776
        %v778 = vpack.c.bf16 %v777, %v777
        %779 = vrot.lane.b32.xlu0 %v714, 64
        %v780 = vpop.permute.xlu0 %779
        %v782 = vsel %vm718, %v778, 0
        %vm784 = vcmask 1043456
        %v786 = vsel %vm784, %v780, 0
        %788 = vmatprep.subr.bf16.mxu0 0
        %789 = vmatpush1.bf16.msra.mxu0 %v786
        %790 = vmatprep.subr.bf16.mxu0 0
        %791 = vmatpush1.bf16.msra.mxu0 0
        %792 = vmatprep.subr.bf16.mxu0 0
        %793 = vmatpush1.bf16.msra.mxu0 0
        %794 = vmatprep.subr.bf16.mxu0 0
        %795 = vmatpush1.bf16.msra.mxu0 0
        %796 = vmatprep.subr.bf16.mxu0 0
        %797 = vmatpush1.bf16.msra.mxu0 0
        %798 = vmatprep.subr.bf16.mxu0 0
        %799 = vmatpush1.bf16.msra.mxu0 0
        %800 = vmatprep.subr.bf16.mxu0 0
        %801 = vmatpush1.bf16.msra.mxu0 0
        %802 = vmatprep.subr.bf16.mxu0 0
        %803 = vmatpush1.bf16.msra.mxu0 0
        %804 = vmatprep.subr.bf16.mxu0 0
        %805 = vmatpush1.bf16.msra.mxu0 0
        %806 = vmatprep.subr.bf16.mxu0 0
        %807 = vmatpush1.bf16.msra.mxu0 0
        %808 = vmatprep.subr.bf16.mxu0 0
        %809 = vmatpush1.bf16.msra.mxu0 0
        %810 = vmatprep.subr.bf16.mxu0 0
        %811 = vmatpush1.bf16.msra.mxu0 0
        %812 = vmatprep.subr.bf16.mxu0 0
        %813 = vmatpush1.bf16.msra.mxu0 0
        %814 = vmatprep.subr.bf16.mxu0 0
        %815 = vmatpush1.bf16.msra.mxu0 0
        %816 = vmatprep.subr.bf16.mxu0 0
        %817 = vmatpush1.bf16.msra.mxu0 0
        %818 = vmatprep.subr.bf16.mxu0 0
        %819 = vmatpush1.bf16.msra.mxu0 0
        %820 = vmatprep.mubr.bf16.mxu0 0
        %821 = vmatmul.mubr.bf16.gmra.mrb[0].mxu0 %v782
        %v822 = vpop.f32.mrb[0].mxu0
        %v823 = vadd.f32 0.0, %v822
        %v824 = vpop.f32.mrb[0].mxu0
        %v825 = vpop.f32.mrb[0].mxu0
        %v826 = vpop.f32.mrb[0].mxu0
        %827 = vdwg.mxu0
        %828 = vrot.lane.b32.xlu0 %v714, 120
        %v829 = vpop.permute.xlu0 %828
        %830 = vrot.lane.b32.xlu0 %v714, 88
        %v831 = vpop.permute.xlu0 %830
        %v833 = vsel %vm718, %v829, 0
        %v836 = vsel %vm718, %v831, 0
        %838 = vmatprep.subr.bf16.mxu0 0
        %839 = vmatpush1.bf16.xpose.msra.mxu0 %v836
        %840 = vmatprep.subr.bf16.mxu0 0
        %841 = vmatpush1.bf16.xpose.msra.mxu0 0
        %842 = vmatprep.subr.bf16.mxu0 0
        %843 = vmatpush1.bf16.xpose.msra.mxu0 0
        %844 = vmatprep.subr.bf16.mxu0 0
        %845 = vmatpush1.bf16.xpose.msra.mxu0 0
        %846 = vmatprep.subr.bf16.mxu0 0
        %847 = vmatpush1.bf16.xpose.msra.mxu0 0
        %848 = vmatprep.subr.bf16.mxu0 0
        %849 = vmatpush1.bf16.xpose.msra.mxu0 0
        %850 = vmatprep.subr.bf16.mxu0 0
        %851 = vmatpush1.bf16.xpose.msra.mxu0 0
        %852 = vmatprep.subr.bf16.mxu0 0
        %853 = vmatpush1.bf16.xpose.msra.mxu0 0
        %854 = vmatprep.subr.bf16.mxu0 0
        %855 = vmatpush1.bf16.xpose.msra.mxu0 0
        %856 = vmatprep.subr.bf16.mxu0 0
        %857 = vmatpush1.bf16.xpose.msra.mxu0 0
        %858 = vmatprep.subr.bf16.mxu0 0
        %859 = vmatpush1.bf16.xpose.msra.mxu0 0
        %860 = vmatprep.subr.bf16.mxu0 0
        %861 = vmatpush1.bf16.xpose.msra.mxu0 0
        %862 = vmatprep.subr.bf16.mxu0 0
        %863 = vmatpush1.bf16.xpose.msra.mxu0 0
        %864 = vmatprep.subr.bf16.mxu0 0
        %865 = vmatpush1.bf16.xpose.msra.mxu0 0
        %866 = vmatprep.subr.bf16.mxu0 0
        %867 = vmatpush1.bf16.xpose.msra.mxu0 0
        %868 = vmatprep.subr.bf16.mxu0 0
        %869 = vmatpush1.bf16.xpose.msra.mxu0 0
        %870 = vmatprep.mubr.bf16.mxu0 0
        %871 = vmatmul.mubr.bf16.gmra.mrb[0].mxu0 %v833
        %v872 = vpop.f32.mrb[0].mxu0
        %v873 = vadd.f32 0.0, %v872
        %v874 = vpop.f32.mrb[0].mxu0
        %v875 = vpop.f32.mrb[0].mxu0
        %v876 = vpop.f32.mrb[0].mxu0
        %877 = vdwg.mxu0
        %v878 = vmul.f32 %v873, 0.35355338
        %v879 = vadd.f32 %v878, %v712
        %v880 = vsel %vm718, %v879, -inf
        %881 = vmax.xlane.f32.xlu0 %v880
        %v882 = vpop.xlane.xlu0 %881
        %v883 = vsub.f32 %v879, %v882
        %v884 = vmul.f32 %v883, 1.442695
        %v885 = vpow.pop %v884
        %v886 = vsel %vm718, %v885, 0.0
        %887 = vadd.xlane.f32.xlu0 %v886
        %v888 = vpop.xlane.xlu0 %887
        %v889 = vrcp.pop %v888
        %v890 = vmul.f32 %v885, %v889
        %v891 = vpack.c.bf16 %v890, %v890
        %892 = vrot.lane.b32.xlu0 %v714, 56
        %v893 = vpop.permute.xlu0 %892
        %v895 = vsel %vm718, %v891, 0
        %v898 = vsel %vm784, %v893, 0
        %900 = vmatprep.subr.bf16.mxu0 0
        %901 = vmatpush1.bf16.msra.mxu0 %v898
        %902 = vmatprep.subr.bf16.mxu0 0
        %903 = vmatpush1.bf16.msra.mxu0 0
        %904 = vmatprep.subr.bf16.mxu0 0
        %905 = vmatpush1.bf16.msra.mxu0 0
        %906 = vmatprep.subr.bf16.mxu0 0
        %907 = vmatpush1.bf16.msra.mxu0 0
        %908 = vmatprep.subr.bf16.mxu0 0
        %909 = vmatpush1.bf16.msra.mxu0 0
        %910 = vmatprep.subr.bf16.mxu0 0
        %911 = vmatpush1.bf16.msra.mxu0 0
        %912 = vmatprep.subr.bf16.mxu0 0
        %913 = vmatpush1.bf16.msra.mxu0 0
        %914 = vmatprep.subr.bf16.mxu0 0
        %915 = vmatpush1.bf16.msra.mxu0 0
        %916 = vmatprep.subr.bf16.mxu0 0
        %917 = vmatpush1.bf16.msra.mxu0 0
        %918 = vmatprep.subr.bf16.mxu0 0
        %919 = vmatpush1.bf16.msra.mxu0 0
        %920 = vmatprep.subr.bf16.mxu0 0
        %921 = vmatpush1.bf16.msra.mxu0 0
        %922 = vmatprep.subr.bf16.mxu0 0
        %923 = vmatpush1.bf16.msra.mxu0 0
        %924 = vmatprep.subr.bf16.mxu0 0
        %925 = vmatpush1.bf16.msra.mxu0 0
        %926 = vmatprep.subr.bf16.mxu0 0
        %927 = vmatpush1.bf16.msra.mxu0 0
        %928 = vmatprep.subr.bf16.mxu0 0
        %929 = vmatpush1.bf16.msra.mxu0 0
        %930 = vmatprep.subr.bf16.mxu0 0
        %931 = vmatpush1.bf16.msra.mxu0 0
        %932 = vmatprep.mubr.bf16.mxu0 0
        %933 = vmatmul.mubr.bf16.gmra.mrb[0].mxu0 %v895
        %v934 = vpop.f32.mrb[0].mxu0
        %v935 = vadd.f32 0.0, %v934
        %v936 = vpop.f32.mrb[0].mxu0
        %v937 = vpop.f32.mrb[0].mxu0
        %v938 = vpop.f32.mrb[0].mxu0
        %939 = vdwg.mxu0
        %940 = vrot.lane.b32.xlu0 %v714, 112
        %v941 = vpop.permute.xlu0 %940
        %942 = vrot.lane.b32.xlu0 %v714, 80
        %v943 = vpop.permute.xlu0 %942
        %v945 = vsel %vm718, %v941, 0
        %v948 = vsel %vm718, %v943, 0
        %950 = vmatprep.subr.bf16.mxu0 0
        %951 = vmatpush1.bf16.xpose.msra.mxu0 %v948
        %952 = vmatprep.subr.bf16.mxu0 0
        %953 = vmatpush1.bf16.xpose.msra.mxu0 0
        %954 = vmatprep.subr.bf16.mxu0 0
        %955 = vmatpush1.bf16.xpose.msra.mxu0 0
        %956 = vmatprep.subr.bf16.mxu0 0
        %957 = vmatpush1.bf16.xpose.msra.mxu0 0
        %958 = vmatprep.subr.bf16.mxu0 0
        %959 = vmatpush1.bf16.xpose.msra.mxu0 0
        %960 = vmatprep.subr.bf16.mxu0 0
        %961 = vmatpush1.bf16.xpose.msra.mxu0 0
        %962 = vmatprep.subr.bf16.mxu0 0
        %963 = vmatpush1.bf16.xpose.msra.mxu0 0
        %964 = vmatprep.subr.bf16.mxu0 0
        %965 = vmatpush1.bf16.xpose.msra.mxu0 0
        %966 = vmatprep.subr.bf16.mxu0 0
        %967 = vmatpush1.bf16.xpose.msra.mxu0 0
        %968 = vmatprep.subr.bf16.mxu0 0
        %969 = vmatpush1.bf16.xpose.msra.mxu0 0
        %970 = vmatprep.subr.bf16.mxu0 0
        %971 = vmatpush1.bf16.xpose.msra.mxu0 0
        %972 = vmatprep.subr.bf16.mxu0 0
        %973 = vmatpush1.bf16.xpose.msra.mxu0 0
        %974 = vmatprep.subr.bf16.mxu0 0
        %975 = vmatpush1.bf16.xpose.msra.mxu0 0
        %976 = vmatprep.subr.bf16.mxu0 0
        %977 = vmatpush1.bf16.xpose.msra.mxu0 0
        %978 = vmatprep.subr.bf16.mxu0 0
        %979 = vmatpush1.bf16.xpose.msra.mxu0 0
        %980 = vmatprep.subr.bf16.mxu0 0
        %981 = vmatpush1.bf16.xpose.msra.mxu0 0
        %982 = vmatprep.mubr.bf16.mxu0 0
        %983 = vmatmul.mubr.bf16.gmra.mrb[0].mxu0 %v945
        %v984 = vpop.f32.mrb[0].mxu0
        %v985 = vadd.f32 0.0, %v984
        %v986 = vpop.f32.mrb[0].mxu0
        %v987 = vpop.f32.mrb[0].mxu0
        %v988 = vpop.f32.mrb[0].mxu0
        %989 = vdwg.mxu0
        %v990 = vmul.f32 %v985, 0.35355338
        %v991 = vadd.f32 %v990, %v712
        %v992 = vsel %vm718, %v991, -inf
        %993 = vmax.xlane.f32.xlu0 %v992
        %v994 = vpop.xlane.xlu0 %993
        %v995 = vsub.f32 %v991, %v994
        %v996 = vmul.f32 %v995, 1.442695
        %v997 = vpow.pop %v996
        %v998 = vsel %vm718, %v997, 0.0
        %999 = vadd.xlane.f32.xlu0 %v998
        %v1000 = vpop.xlane.xlu0 %999
        %v1001 = vrcp.pop %v1000
        %v1002 = vmul.f32 %v997, %v1001
        %v1003 = vpack.c.bf16 %v1002, %v1002
        %1004 = vrot.lane.b32.xlu0 %v714, 48
        %v1005 = vpop.permute.xlu0 %1004
        %v1007 = vsel %vm718, %v1003, 0
        %v1010 = vsel %vm784, %v1005, 0
        %1012 = vmatprep.subr.bf16.mxu0 0
        %1013 = vmatpush1.bf16.msra.mxu0 %v1010
        %1014 = vmatprep.subr.bf16.mxu0 0
        %1015 = vmatpush1.bf16.msra.mxu0 0
        %1016 = vmatprep.subr.bf16.mxu0 0
        %1017 = vmatpush1.bf16.msra.mxu0 0
        %1018 = vmatprep.subr.bf16.mxu0 0
        %1019 = vmatpush1.bf16.msra.mxu0 0
        %1020 = vmatprep.subr.bf16.mxu0 0
        %1021 = vmatpush1.bf16.msra.mxu0 0
        %1022 = vmatprep.subr.bf16.mxu0 0
        %1023 = vmatpush1.bf16.msra.mxu0 0
        %1024 = vmatprep.subr.bf16.mxu0 0
        %1025 = vmatpush1.bf16.msra.mxu0 0
        %1026 = vmatprep.subr.bf16.mxu0 0
        %1027 = vmatpush1.bf16.msra.mxu0 0
        %1028 = vmatprep.subr.bf16.mxu0 0
        %1029 = vmatpush1.bf16.msra.mxu0 0
        %1030 = vmatprep.subr.bf16.mxu0 0
        %1031 = vmatpush1.bf16.msra.mxu0 0
        %1032 = vmatprep.subr.bf16.mxu0 0
        %1033 = vmatpush1.bf16.msra.mxu0 0
        %1034 = vmatprep.subr.bf16.mxu0 0
        %1035 = vmatpush1.bf16.msra.mxu0 0
        %1036 = vmatprep.subr.bf16.mxu0 0
        %1037 = vmatpush1.bf16.msra.mxu0 0
        %1038 = vmatprep.subr.bf16.mxu0 0
        %1039 = vmatpush1.bf16.msra.mxu0 0
        %1040 = vmatprep.subr.bf16.mxu0 0
        %1041 = vmatpush1.bf16.msra.mxu0 0
        %1042 = vmatprep.subr.bf16.mxu0 0
        %1043 = vmatpush1.bf16.msra.mxu0 0
        %1044 = vmatprep.mubr.bf16.mxu0 0
        %1045 = vmatmul.mubr.bf16.gmra.mrb[0].mxu0 %v1007
        %v1046 = vpop.f32.mrb[0].mxu0
        %v1047 = vadd.f32 0.0, %v1046
        %v1048 = vpop.f32.mrb[0].mxu0
        %v1049 = vpop.f32.mrb[0].mxu0
        %v1050 = vpop.f32.mrb[0].mxu0
        %1051 = vdwg.mxu0
        %1052 = vrot.lane.b32.xlu0 %v714, 104
        %v1053 = vpop.permute.xlu0 %1052
        %1054 = vrot.lane.b32.xlu0 %v714, 72
        %v1055 = vpop.permute.xlu0 %1054
        %v1057 = vsel %vm718, %v1053, 0
        %v1060 = vsel %vm718, %v1055, 0
        %1062 = vmatprep.subr.bf16.mxu0 0
        %1063 = vmatpush1.bf16.xpose.msra.mxu0 %v1060
        %1064 = vmatprep.subr.bf16.mxu0 0
        %1065 = vmatpush1.bf16.xpose.msra.mxu0 0
        %1066 = vmatprep.subr.bf16.mxu0 0
        %1067 = vmatpush1.bf16.xpose.msra.mxu0 0
        %1068 = vmatprep.subr.bf16.mxu0 0
        %1069 = vmatpush1.bf16.xpose.msra.mxu0 0
        %1070 = vmatprep.subr.bf16.mxu0 0
        %1071 = vmatpush1.bf16.xpose.msra.mxu0 0
        %1072 = vmatprep.subr.bf16.mxu0 0
        %1073 = vmatpush1.bf16.xpose.msra.mxu0 0
        %1074 = vmatprep.subr.bf16.mxu0 0
        %1075 = vmatpush1.bf16.xpose.msra.mxu0 0
        %1076 = vmatprep.subr.bf16.mxu0 0
        %1077 = vmatpush1.bf16.xpose.msra.mxu0 0
        %1078 = vmatprep.subr.bf16.mxu0 0
        %1079 = vmatpush1.bf16.xpose.msra.mxu0 0
        %1080 = vmatprep.subr.bf16.mxu0 0
        %1081 = vmatpush1.bf16.xpose.msra.mxu0 0
        %1082 = vmatprep.subr.bf16.mxu0 0
        %1083 = vmatpush1.bf16.xpose.msra.mxu0 0
        %1084 = vmatprep.subr.bf16.mxu0 0
        %1085 = vmatpush1.bf16.xpose.msra.mxu0 0
        %1086 = vmatprep.subr.bf16.mxu0 0
        %1087 = vmatpush1.bf16.xpose.msra.mxu0 0
        %1088 = vmatprep.subr.bf16.mxu0 0
        %1089 = vmatpush1.bf16.xpose.msra.mxu0 0
        %1090 = vmatprep.subr.bf16.mxu0 0
        %1091 = vmatpush1.bf16.xpose.msra.mxu0 0
        %1092 = vmatprep.subr.bf16.mxu0 0
        %1093 = vmatpush1.bf16.xpose.msra.mxu0 0
        %1094 = vmatprep.mubr.bf16.mxu0 0
        %1095 = vmatmul.mubr.bf16.gmra.mrb[0].mxu0 %v1057
        %v1096 = vpop.f32.mrb[0].mxu0
        %v1097 = vadd.f32 0.0, %v1096
        %v1098 = vpop.f32.mrb[0].mxu0
        %v1099 = vpop.f32.mrb[0].mxu0
        %v1100 = vpop.f32.mrb[0].mxu0
        %1101 = vdwg.mxu0
        %v1102 = vmul.f32 %v1097, 0.35355338
        %v1103 = vadd.f32 %v1102, %v712
        %v1104 = vsel %vm718, %v1103, -inf
        %1105 = vmax.xlane.f32.xlu0 %v1104
        %v1106 = vpop.xlane.xlu0 %1105
        %v1107 = vsub.f32 %v1103, %v1106
        %v1108 = vmul.f32 %v1107, 1.442695
        %v1109 = vpow.pop %v1108
        %v1110 = vsel %vm718, %v1109, 0.0
        %1111 = vadd.xlane.f32.xlu0 %v1110
        %v1112 = vpop.xlane.xlu0 %1111
        %v1113 = vrcp.pop %v1112
        %v1114 = vmul.f32 %v1109, %v1113
        %v1115 = vpack.c.bf16 %v1114, %v1114
        %1116 = vrot.lane.b32.xlu0 %v714, 40
        %v1117 = vpop.permute.xlu0 %1116
        %v1119 = vsel %vm718, %v1115, 0
        %v1122 = vsel %vm784, %v1117, 0
        %1124 = vmatprep.subr.bf16.mxu0 0
        %1125 = vmatpush1.bf16.msra.mxu0 %v1122
        %1126 = vmatprep.subr.bf16.mxu0 0
        %1127 = vmatpush1.bf16.msra.mxu0 0
        %1128 = vmatprep.subr.bf16.mxu0 0
        %1129 = vmatpush1.bf16.msra.mxu0 0
        %1130 = vmatprep.subr.bf16.mxu0 0
        %1131 = vmatpush1.bf16.msra.mxu0 0
        %1132 = vmatprep.subr.bf16.mxu0 0
        %1133 = vmatpush1.bf16.msra.mxu0 0
        %1134 = vmatprep.subr.bf16.mxu0 0
        %1135 = vmatpush1.bf16.msra.mxu0 0
        %1136 = vmatprep.subr.bf16.mxu0 0
        %1137 = vmatpush1.bf16.msra.mxu0 0
        %1138 = vmatprep.subr.bf16.mxu0 0
        %1139 = vmatpush1.bf16.msra.mxu0 0
        %1140 = vmatprep.subr.bf16.mxu0 0
        %1141 = vmatpush1.bf16.msra.mxu0 0
        %1142 = vmatprep.subr.bf16.mxu0 0
        %1143 = vmatpush1.bf16.msra.mxu0 0
        %1144 = vmatprep.subr.bf16.mxu0 0
        %1145 = vmatpush1.bf16.msra.mxu0 0
        %1146 = vmatprep.subr.bf16.mxu0 0
        %1147 = vmatpush1.bf16.msra.mxu0 0
        %1148 = vmatprep.subr.bf16.mxu0 0
        %1149 = vmatpush1.bf16.msra.mxu0 0
        %1150 = vmatprep.subr.bf16.mxu0 0
        %1151 = vmatpush1.bf16.msra.mxu0 0
        %1152 = vmatprep.subr.bf16.mxu0 0
        %1153 = vmatpush1.bf16.msra.mxu0 0
        %1154 = vmatprep.subr.bf16.mxu0 0
        %1155 = vmatpush1.bf16.msra.mxu0 0
        %1156 = vmatprep.mubr.bf16.mxu0 0
        %1157 = vmatmul.mubr.bf16.gmra.mrb[0].mxu0 %v1119
        %v1158 = vpop.f32.mrb[0].mxu0
        %v1159 = vadd.f32 0.0, %v1158
        %v1160 = vpop.f32.mrb[0].mxu0
        %v1161 = vpop.f32.mrb[0].mxu0
        %v1162 = vpop.f32.mrb[0].mxu0
        %1163 = vdwg.mxu0
        %1165 = vrot.lane.b32.xlu0 %v935, 8
        %v1166 = vpop.permute.xlu0 %1165
        %1169 = vrot.lane.b32.xlu0 %v1047, 16
        %v1170 = vpop.permute.xlu0 %1169
        %1173 = vrot.lane.b32.xlu0 %v1159, 24
        %v1174 = vpop.permute.xlu0 %1173
        %v1176 = vsel %vm718, %v823, %v1166
        %vm1177 = vcmask 130048
        %v1178 = vsel %vm1177, %v1176, %v1170
        %vm1179 = vcmask 195584
        %v1180 = vsel %vm1179, %v1178, %v1174
        %v1181 = vpack.c.bf16 %v1180, %v1180
        %v1182 = vld [vmem:[%s6] sm:$0xf]
        %v1183 = vld [vmem:[%s6 + $0x4] sm:$0xf]
        %v1184 = vld [vmem:[%s6 + $0x8] sm:$0xf]
        %v1185 = vld [vmem:[%s6 + $0xc] sm:$0xf]
        %v1186 = vld [vmem:[#allocation8] sm:$0x1]
        %v1188 = vlaneseq
        %v1189 = vshrl.u32 %v1188, 7
        %v1190 = vsub.s32 0, %v1189
        %v1191 = vrot.slane %v1186, %v1190
        %v1197 = vunpack.c.l.b16 %v1182
        %v1198 = vunpack.c.l.b16 %v1183
        %v1199 = vunpack.c.l.b16 %v1184
        %v1200 = vunpack.c.l.b16 %v1185
        %v1201 = vpack.c.b16 %v1198, %v1197
        %v1202 = vpack.c.b16 %v1200, %v1199
        %v1206 = vsel %vm611, %v1181, 0
        %1208 = vmatprep.subr.bf16.mxu0 0
        %1209 = vmatpush1.bf16.msra.mxu0 %v1201
        %1210 = vmatprep.subr.bf16.mxu0 0
        %1211 = vmatpush1.bf16.msra.mxu0 %v1202
        %1212 = vmatprep.subr.bf16.mxu0 0
        %1213 = vmatpush1.bf16.msra.mxu0 0
        %1214 = vmatprep.subr.bf16.mxu0 0
        %1215 = vmatpush1.bf16.msra.mxu0 0
        %1216 = vmatprep.subr.bf16.mxu0 0
        %1217 = vmatpush1.bf16.msra.mxu0 0
        %1218 = vmatprep.subr.bf16.mxu0 0
        %1219 = vmatpush1.bf16.msra.mxu0 0
        %1220 = vmatprep.subr.bf16.mxu0 0
        %1221 = vmatpush1.bf16.msra.mxu0 0
        %1222 = vmatprep.subr.bf16.mxu0 0
        %1223 = vmatpush1.bf16.msra.mxu0 0
        %1224 = vmatprep.subr.bf16.mxu0 0
        %1225 = vmatpush1.bf16.msra.mxu0 0
        %1226 = vmatprep.subr.bf16.mxu0 0
        %1227 = vmatpush1.bf16.msra.mxu0 0
        %1228 = vmatprep.subr.bf16.mxu0 0
        %1229 = vmatpush1.bf16.msra.mxu0 0
        %1230 = vmatprep.subr.bf16.mxu0 0
        %1231 = vmatpush1.bf16.msra.mxu0 0
        %1232 = vmatprep.subr.bf16.mxu0 0
        %1233 = vmatpush1.bf16.msra.mxu0 0
        %1234 = vmatprep.subr.bf16.mxu0 0
        %1235 = vmatpush1.bf16.msra.mxu0 0
        %1236 = vmatprep.subr.bf16.mxu0 0
        %1237 = vmatpush1.bf16.msra.mxu0 0
        %1238 = vmatprep.subr.bf16.mxu0 0
        %1239 = vmatpush1.bf16.msra.mxu0 0
        %1240 = vmatprep.mubr.bf16.mxu0 0
        %1241 = vmatmul.mubr.bf16.gmra.mrb[0].mxu0 %v1206
        %v1242 = vpop.f32.mrb[0].mxu0
        %v1243 = vadd.f32 %v1191, %v1242
        %v1244 = vpop.f32.mrb[0].mxu0
        %v1245 = vpop.f32.mrb[0].mxu0
        %v1246 = vpop.f32.mrb[0].mxu0
        %1247 = vdwg.mxu0
        %v1248 = vadd.f32 %v1243, %v639
        %v1249 = vld [vmem:[#allocation10] sm:$0x1]
        %v1250 = vld [vmem:[#allocation11] sm:$0x1]
        %v1251 = vsel %vm611, %v1248, 0.0
        %1252 = vadd.xlane.f32.xlu0 %v1251
        %v1253 = vpop.xlane.xlu0 %1252
        %v1254 = vmul.f32 %v1253, %v615
        %v1255 = vsub.f32 %v1248, %v1254
        %v1256 = vmul.f32 %v1255, %v1255
        %v1257 = vsel %vm611, %v1256, 0.0
        %1258 = vadd.xlane.f32.xlu0 %v1257
        %v1259 = vpop.xlane.xlu0 %1258
        %v1260 = vmul.f32 %v1259, %v615
        %v1261 = vadd.f32 %v1260, 1e-12
        %v1262 = vrsqrt.pop %v1261
        %v1263 = vmul.f32 %v1255, %v1262
        %v1265 = vlaneseq
        %v1266 = vshrl.u32 %v1265, 7
        %v1267 = vsub.s32 0, %v1266
        %v1268 = vrot.slane %v1249, %v1267
        %v1270 = vmul.f32 %v1263, %v1268
        %v1272 = vlaneseq
        %v1273 = vshrl.u32 %v1272, 7
        %v1274 = vsub.s32 0, %v1273
        %v1275 = vrot.slane %v1250, %v1274
        %v1277 = vadd.f32 %v1270, %v1275
        %v1278 = vpack.c.bf16 %v1277, %v1277
        %v1279 = vld [vmem:[%s10] sm:$0xf]
        %v1280 = vld [vmem:[%s10 + $0x4] sm:$0xf]
        %v1281 = vld [vmem:[%s10 + $0x8] sm:$0xf]
        %v1282 = vld [vmem:[%s10 + $0xc] sm:$0xf]
        %v1283 = vld [vmem:[%s11] sm:$0x1]
        %v1285 = vlaneseq
        %v1286 = vshrl.u32 %v1285, 7
        %v1287 = vsub.s32 0, %v1286
        %v1288 = vrot.slane %v1283, %v1287
        %v1294 = vunpack.c.l.b16 %v1279
        %v1295 = vunpack.c.l.b16 %v1280
        %v1296 = vunpack.c.l.b16 %v1281
        %v1297 = vunpack.c.l.b16 %v1282
        %v1298 = vpack.c.b16 %v1295, %v1294
        %v1299 = vpack.c.b16 %v1297, %v1296
        %v1303 = vsel %vm611, %v1278, 0
        %1305 = vmatprep.subr.bf16.mxu0 0
        %1306 = vmatpush1.bf16.msra.mxu0 %v1298
        %1307 = vmatprep.subr.bf16.mxu0 0
        %1308 = vmatpush1.bf16.msra.mxu0 %v1299
        %1309 = vmatprep.subr.bf16.mxu0 0
        %1310 = vmatpush1.bf16.msra.mxu0 0
        %1311 = vmatprep.subr.bf16.mxu0 0
        %1312 = vmatpush1.bf16.msra.mxu0 0
        %1313 = vmatprep.subr.bf16.mxu0 0
        %1314 = vmatpush1.bf16.msra.mxu0 0
        %1315 = vmatprep.subr.bf16.mxu0 0
        %1316 = vmatpush1.bf16.msra.mxu0 0
        %1317 = vmatprep.subr.bf16.mxu0 0
        %1318 = vmatpush1.bf16.msra.mxu0 0
        %1319 = vmatprep.subr.bf16.mxu0 0
        %1320 = vmatpush1.bf16.msra.mxu0 0
        %1321 = vmatprep.subr.bf16.mxu0 0
        %1322 = vmatpush1.bf16.msra.mxu0 0
        %1323 = vmatprep.subr.bf16.mxu0 0
        %1324 = vmatpush1.bf16.msra.mxu0 0
        %1325 = vmatprep.subr.bf16.mxu0 0
        %1326 = vmatpush1.bf16.msra.mxu0 0
        %1327 = vmatprep.subr.bf16.mxu0 0
        %1328 = vmatpush1.bf16.msra.mxu0 0
        %1329 = vmatprep.subr.bf16.mxu0 0
        %1330 = vmatpush1.bf16.msra.mxu0 0
        %1331 = vmatprep.subr.bf16.mxu0 0
        %1332 = vmatpush1.bf16.msra.mxu0 0
        %1333 = vmatprep.subr.bf16.mxu0 0
        %1334 = vmatpush1.bf16.msra.mxu0 0
        %1335 = vmatprep.subr.bf16.mxu0 0
        %1336 = vmatpush1.bf16.msra.mxu0 0
        %1337 = vmatprep.mubr.bf16.mxu0 0
        %1338 = vmatmul.mubr.bf16.gmra.mrb[0].mxu0 %v1303
        %v1339 = vpop.f32.mrb[0].mxu0
        %v1340 = vadd.f32 %v1288, %v1339
        %v1341 = vpop.f32.mrb[0].mxu0
        %v1342 = vpop.f32.mrb[0].mxu0
        %v1343 = vpop.f32.mrb[0].mxu0
        %1344 = vdwg.mxu0
        %v1345 = vmul.f32 %v1340, 0.5
        %v1346 = vmul.f32 %v1340, 0.044715
        %v1347 = vmul.f32 %v1346, %v1340
        %v1348 = vmul.f32 %v1347, %v1340
        %v1349 = vadd.f32 %v1340, %v1348
        %v1350 = vmul.f32 %v1349, 0.7978846
        %v1351 = vtanh.pop %v1350
        %v1352 = vadd.f32 %v1351, 1.0
        %v1353 = vmul.f32 %v1345, %v1352
        %v1354 = vpack.c.bf16 %v1353, %v1353
        %v1355 = vld [vmem:[%s12] sm:$0xf]
        %v1356 = vld [vmem:[%s12 + $0x4] sm:$0xf]
        %v1357 = vld [vmem:[%s12 + $0x8] sm:$0xf]
        %v1358 = vld [vmem:[%s12 + $0xc] sm:$0xf]
        %v1359 = vld [vmem:[%s12 + $0x10] sm:$0xf]
        %v1360 = vld [vmem:[%s12 + $0x14] sm:$0xf]
        %v1361 = vld [vmem:[%s12 + $0x18] sm:$0xf]
        %v1362 = vld [vmem:[%s12 + $0x1c] sm:$0xf]
        %v1363 = vld [vmem:[%s13] sm:$0x1]
        %v1365 = vlaneseq
        %v1366 = vshrl.u32 %v1365, 7
        %v1367 = vsub.s32 0, %v1366
        %v1368 = vrot.slane %v1363, %v1367
        %v1378 = vunpack.c.l.b16 %v1355
        %v1379 = vunpack.c.l.b16 %v1356
        %v1380 = vunpack.c.l.b16 %v1357
        %v1381 = vunpack.c.l.b16 %v1358
        %v1382 = vunpack.c.l.b16 %v1359
        %v1383 = vunpack.c.l.b16 %v1360
        %v1384 = vunpack.c.l.b16 %v1361
        %v1385 = vunpack.c.l.b16 %v1362
        %v1386 = vpack.c.b16 %v1379, %v1378
        %v1387 = vpack.c.b16 %v1381, %v1380
        %v1388 = vpack.c.b16 %v1383, %v1382
        %v1389 = vpack.c.b16 %v1385, %v1384
        %vm1394 = vcmask 523264
        %v1396 = vsel %vm1394, %v1354, 0
        %1398 = vmatprep.subr.bf16.mxu0 0
        %1399 = vmatpush1.bf16.msra.mxu0 %v1386
        %1400 = vmatprep.subr.bf16.mxu0 0
        %1401 = vmatpush1.bf16.msra.mxu0 %v1387
        %1402 = vmatprep.subr.bf16.mxu0 0
        %1403 = vmatpush1.bf16.msra.mxu0 %v1388
        %1404 = vmatprep.subr.bf16.mxu0 0
        %1405 = vmatpush1.bf16.msra.mxu0 %v1389
        %1406 = vmatprep.subr.bf16.mxu0 0
        %1407 = vmatpush1.bf16.msra.mxu0 0
        %1408 = vmatprep.subr.bf16.mxu0 0
        %1409 = vmatpush1.bf16.msra.mxu0 0
        %1410 = vmatprep.subr.bf16.mxu0 0
        %1411 = vmatpush1.bf16.msra.mxu0 0
        %1412 = vmatprep.subr.bf16.mxu0 0
        %1413 = vmatpush1.bf16.msra.mxu0 0
        %1414 = vmatprep.subr.bf16.mxu0 0
        %1415 = vmatpush1.bf16.msra.mxu0 0
        %1416 = vmatprep.subr.bf16.mxu0 0
        %1417 = vmatpush1.bf16.msra.mxu0 0
        %1418 = vmatprep.subr.bf16.mxu0 0
        %1419 = vmatpush1.bf16.msra.mxu0 0
        %1420 = vmatprep.subr.bf16.mxu0 0
        %1421 = vmatpush1.bf16.msra.mxu0 0
        %1422 = vmatprep.subr.bf16.mxu0 0
        %1423 = vmatpush1.bf16.msra.mxu0 0
        %1424 = vmatprep.subr.bf16.mxu0 0
        %1425 = vmatpush1.bf16.msra.mxu0 0
        %1426 = vmatprep.subr.bf16.mxu0 0
        %1427 = vmatpush1.bf16.msra.mxu0 0
        %1428 = vmatprep.subr.bf16.mxu0 0
        %1429 = vmatpush1.bf16.msra.mxu0 0
        %1430 = vmatprep.mubr.bf16.mxu0 0
        %1431 = vmatmul.mubr.bf16.gmra.mrb[0].mxu0 %v1396
        %v1432 = vpop.f32.mrb[0].mxu0
        %v1433 = vadd.f32 %v1368, %v1432
        %v1434 = vpop.f32.mrb[0].mxu0
        %v1435 = vpop.f32.mrb[0].mxu0
        %v1436 = vpop.f32.mrb[0].mxu0
        %1437 = vdwg.mxu0
        %v1438 = vadd.f32 %v1433, %v1277
        %v1439 = vld [vmem:[%s14] sm:$0x1]
        %v1440 = vld [vmem:[%s15] sm:$0x1]
        %v1441 = vsel %vm611, %v1438, 0.0
        %1442 = vadd.xlane.f32.xlu0 %v1441
        %v1443 = vpop.xlane.xlu0 %1442
        %v1444 = vmul.f32 %v1443, %v615
        %v1445 = vsub.f32 %v1438, %v1444
        %v1446 = vmul.f32 %v1445, %v1445
        %v1447 = vsel %vm611, %v1446, 0.0
        %1448 = vadd.xlane.f32.xlu0 %v1447
        %v1449 = vpop.xlane.xlu0 %1448
        %v1450 = vmul.f32 %v1449, %v615
        %v1451 = vadd.f32 %v1450, 1e-12
        %v1452 = vrsqrt.pop %v1451
        %v1453 = vmul.f32 %v1445, %v1452
        %v1455 = vlaneseq
        %v1456 = vshrl.u32 %v1455, 7
        %v1457 = vsub.s32 0, %v1456
        %v1458 = vrot.slane %v1439, %v1457
        %v1460 = vmul.f32 %v1453, %v1458
        %v1462 = vlaneseq
        %v1463 = vshrl.u32 %v1462, 7
        %v1464 = vsub.s32 0, %v1463
        %v1465 = vrot.slane %v1440, %v1464
        %v1467 = vadd.f32 %v1460, %v1465
        %1468 = vst.msk [vmem:[%s599] sm:$0xff] %vm611, %v1467
        %s1469 = sand.u32 %s388, 1
        %s1470 = scalar_lea.sflag [#allocation4], %s1469
        %s1471 = sand.u32 %s388, 1
        %s1472 = smul.addr %s1471, 8
        %s1473 = scalar_lea.vmem [#allocation13], %s1472
        // Predicated region
        $region109: #{tpu_custom_call.1} parent=83 // pred_check
          %p1474 = pneg %p398
        $region110: #{tpu_custom_call.1} parent=83 // pred_check_branch
          %1476 = sbr.rel (%p1474) target = $region112
        $region111: #{tpu_custom_call.1} parent=83 // pred_region
          %s1478 = ssub.s32 128, 128
          %1479 = vsyncadd %s1470, %s1478
          %s1480 = smul.addr %s34, 128
          %s1481 = scalar_lea.hbm %s16, %s1480
          %s1483 = sshll.u32 %s1473, 4
          %s1484 = int_to_ptr.vmem [resolvable:$true] %s1483
          %1486 = dma.vmem_to_hbm [thread:$0]  %s1484, 128, %s1481, %s1470
        $region112: #{tpu_custom_call.1} parent=83 // pred_fallthru
          _
      $region84: #{tpu_custom_call.1} parent=5 // pred_fallthru
        _
      %p1487 = scmp.le.s32.totalorder 2, %s29
      // Predicated region
      $region113: #{tpu_custom_call.1} parent=5 // pred_check
        %p1488 = pneg %p1487
      $region114: #{tpu_custom_call.1} parent=5 // pred_check_branch
        %1490 = sbr.rel (%p1488) target = $region116
      $region115: #{tpu_custom_call.1} parent=5 // pred_region
        %s1491 = ssub.s32 %s29, 2
        // Predicated region
        $region117: #{tpu_custom_call.1} parent=115 // pred_check
          %p1492 = pneg %p404
        $region118: #{tpu_custom_call.1} parent=115 // pred_check_branch
          %1494 = sbr.rel (%p1492) target = $region120
        $region119: #{tpu_custom_call.1} parent=115 // pred_region
          %s1495 = sand.u32 %s389, 1
          %s1496 = scalar_lea.sflag [#allocation4], %s1495
          %s1497 = sand.u32 %s389, 1
          %s1498 = smul.addr %s1497, 8
          %s1499 = scalar_lea.vmem [#allocation13], %s1498
          %1500 = dma.done %s1496, 128
        $region120: #{tpu_custom_call.1} parent=115 // pred_fallthru
          _
      $region116: #{tpu_custom_call.1} parent=5 // pred_fallthru
        _
    $region6: #{tpu_custom_call.1} parent=1 // loop_footer
      %s33 = sadd.s32 1, %s29
    $region7: #{tpu_custom_call.1} parent=1 // loop_footer_branch
      %28 = sbr.rel target = $region3
    $region8: #{tpu_custom_call.1} parent=1 // loop_exit
      _
    %1501 = vsyncpa [#allocation3], 1
    %s1502 = scalar_lea.sflag [#allocation3], 1
    %1503 = vsyncpa %s1502, 1
    %1504 = vsyncpa [#allocation6], 1
    %1505 = vsyncpa [#allocation9], 1
    %1506 = vsyncpa [#allocation12], 1
    %1507 = vsyncpa [#allocation4], 1
    %s1508 = scalar_lea.sflag [#allocation4], 1
    %1509 = vsyncpa %s1508, 1

</llo_original>
